<compile_context>
chip_gen: v7x
topology: tpu7x:2x2x1
jax: 0.10.0
libtpu: 0.0.40
codegen_flags: <defaults>
</compile_context>

<pallas_src>
import numpy as np
import jax
import jax.numpy as jnp
from jax.experimental import pallas as pl
from jax.experimental.pallas import tpu as pltpu

C = 4       # number of communities == number of base GNNs in the ensemble
N = 16      # nodes per community (all communities padded/equal size)
F_IN = 8    # input node-feature dim
F_OUT = 32  # output node-feature dim

CN = C * N            # 64  (total nodes, sublane axis)
CF_IN = C * F_IN      # 32
CF_OUT = C * F_OUT    # 128 (lane-dense slab width)


# ----------------------------- Pallas kernel -------------------------------
def ensemble_gcn_kernel(a_ref, x_ref, w_ref, b_ref, o_ref):
    # a_ref: (CN, CN)        block-diagonal normalized adjacency (all communities)
    # x_ref: (CN, CF_IN)     block-structured node features
    # w_ref: (CF_IN, CF_OUT) block-diagonal stacked ensemble weights
    # b_ref: (1, CF_OUT)     concatenated per-community biases
    # o_ref: (C, N, F_OUT)   stacked per-community outputs (== torch.stack)
    #
    # Reassociated: (A @ X) @ W  — half the MACs of A @ (X @ W) since F_IN < F_OUT.
    ax = jnp.dot(a_ref[...], x_ref[...],
                 preferred_element_type=jnp.float32,
                 precision=jax.lax.Precision.HIGHEST)          # (64, 32)
    h = jnp.dot(ax, w_ref[...],
                preferred_element_type=jnp.float32,
                precision=jax.lax.Precision.HIGHEST)           # (64, 128)
    h = jnp.maximum(h + b_ref[...], 0.0)
    # In-kernel diagonal-block extraction: only the diagonal blocks of the
    # block-diagonal slab are the real per-community results.  C=4 static
    # slices -> 4 small stores; off-diagonal garbage never leaves the kernel.
    for c in range(C):  # static Python loop (C is a compile-time constant)
        o_ref[c] = h[c * N:(c + 1) * N, c * F_OUT:(c + 1) * F_OUT]


def ensemble_gnn_forward(a_bd, x_bd, w_bd, b_row):
    """All communities' GNNs fused into one kernel call (block-diag form).

    No grid / no software pipeline: the whole working set (~70 KiB) lives in
    VMEM for the single invocation.
    """
    vmem = pltpu.MemorySpace.VMEM
    return pl.pallas_call(
        ensemble_gcn_kernel,
        out_shape=jax.ShapeDtypeStruct((C, N, F_OUT), jnp.float32),
        in_specs=[
            pl.BlockSpec(memory_space=vmem),   # a_bd
            pl.BlockSpec(memory_space=vmem),   # x_bd
            pl.BlockSpec(memory_space=vmem),   # w_bd
            pl.BlockSpec(memory_space=vmem),   # b_row
        ],
        out_specs=pl.BlockSpec(memory_space=vmem),
    )(a_bd, x_bd, w_bd, b_row)


# -------------------- host-side glue (community extraction) ----------------
def extract_communities_np(x, edge_index, edge_attr, communities):
    """Mirrors `_extract_communities`: keep only within-community edges,
    remap node ids to community-local ids, gather node features."""
    out = []
    for community in communities:
        node_to_c = {int(n): i for i, n in enumerate(community)}
        c_edges, c_attrs = [], []
        for e in range(edge_index.shape[1]):
            u, v = int(edge_index[0, e]), int(edge_index[1, e])
            if u in node_to_c and v in node_to_c:
                c_edges.append((node_to_c[u], node_to_c[v]))
                c_attrs.append(edge_attr[e])
        c_edge_index = np.array(c_edges, dtype=np.int64).T
        c_edge_attr = np.stack(c_attrs)
        c_x = x[np.array(community)]
        out.append((c_x, c_edge_index, c_edge_attr))
    return out


def normalized_adjacency(c_edge_index, c_edge_attr, n):
    A = np.zeros((n, n), dtype=np.float32)
    src, dst = c_edge_index
    for e in range(src.shape[0]):
        A[dst[e], src[e]] += float(c_edge_attr[e, 0])
    A = A + np.eye(n, dtype=np.float32)               # self-loops
    d = A.sum(axis=1)
    dinv = 1.0 / np.sqrt(np.maximum(d, 1e-12))
    return (dinv[:, None] * A) * dinv[None, :]


def pack_block_diag(mats):
    """(C, n, m) stacked per-community matrices -> (C*n, C*m) block-diagonal."""
    c, n, m = mats.shape
    out = np.zeros((c * n, c * m), dtype=np.float32)
    for ci in range(c):
        out[ci * n:(ci + 1) * n, ci * m:(ci + 1) * m] = mats[ci]
    return out


# --------------------------------- main -------------------------------------
if __name__ == "__main__":
    key = jax.random.PRNGKey(0)
    k_x, k_ea, k_w, k_b = jax.random.split(key, 4)

    num_nodes = C * N
    communities = [list(range(c * N, (c + 1) * N)) for c in range(C)]

    # Graph: node features, edges (ring within each community + some
    # cross-community edges that _extract_communities must filter out).
    x_np = np.asarray(jax.random.normal(k_x, (num_nodes, F_IN), jnp.float32))
    edges = []
    for c in range(C):
        base = c * N
        for i in range(N):
            edges.append((base + i, base + (i + 1) % N))          # within
            edges.append((base + (i + 1) % N, base + i))
        edges.append((base, (base + N) % num_nodes))              # cross (dropped)
    edge_index_np = np.array(edges, dtype=np.int64).T             # (2, E)
    E = edge_index_np.shape[1]
    edge_attr_np = np.asarray(
        jax.random.uniform(k_ea, (E, 1), jnp.float32, 0.5, 1.5))

    # One base GNN (weight + bias) per community, deterministic init.
    w_all = np.asarray(jax.random.normal(k_w, (C, F_IN, F_OUT), jnp.float32)) * 0.1
    b_all = np.asarray(jax.random.normal(k_b, (C, 1, F_OUT), jnp.float32)) * 0.1

    # Glue: per-community subgraphs -> dense normalized adjacency + features.
    subgraphs = extract_communities_np(x_np, edge_index_np, edge_attr_np,
                                       communities)
    a_all = np.stack([normalized_adjacency(ei, ea, N)
                      for (_, ei, ea) in subgraphs])               # (C, N, N)
    x_all = np.stack([cx for (cx, _, _) in subgraphs])             # (C, N, F_IN)

    # Pack the ensemble into block-diagonal / lane-dense operands.
    a_bd = jnp.asarray(pack_block_diag(a_all))                     # (64, 64)
    x_bd = jnp.asarray(pack_block_diag(x_all))                     # (64, 32)
    w_bd = jnp.asarray(pack_block_diag(w_all))                     # (32, 128)
    b_row = jnp.asarray(b_all.reshape(1, CF_OUT))                  # (1, 128)

    # Pallas kernel: fused ensemble forward, stacked outputs written in-kernel.
    out = ensemble_gnn_forward(a_bd, x_bd, w_bd, b_row)
    out = jax.block_until_ready(out)

    # Pure-numpy reference (per-community GCN layer == torch.stack(outputs)).
    ref = np.maximum(
        np.einsum("cnm,cmf,cfo->cno",
                  a_all.astype(np.float64),
                  x_all.astype(np.float64),
                  w_all.astype(np.float64)) + b_all.astype(np.float64),
        0.0).astype(np.float32)
    assert out.shape == (C, N, F_OUT)
    np.testing.assert_allclose(np.asarray(out), ref, rtol=1e-5, atol=1e-5)
    print("KERNEL_OK")
</pallas_src>

<mosaic_0001>
module attributes {stable_mosaic.version = 11 : i64} {
  func.func @ensemble_gcn_kernel(%arg0: memref<64x64xf32, #tpu.memory_space<vmem>>, %arg1: memref<64x32xf32, #tpu.memory_space<vmem>>, %arg2: memref<32x128xf32, #tpu.memory_space<vmem>>, %arg3: memref<1x128xf32, #tpu.memory_space<vmem>>, %arg4: memref<4x16x32xf32, #tpu.memory_space<vmem>>) attributes {dimension_semantics = [], scalar_prefetch = 0 : i64, scratch_operands = 0 : i64, tpu.core_type = #tpu.core_type<tc>} {
    %c0 = arith.constant 0 : index
    %c0_0 = arith.constant 0 : index
    %0 = vector.load %arg0[%c0, %c0_0] : memref<64x64xf32, #tpu.memory_space<vmem>>, vector<64x64xf32>
    %c0_1 = arith.constant 0 : index
    %c0_2 = arith.constant 0 : index
    %1 = vector.load %arg1[%c0_1, %c0_2] : memref<64x32xf32, #tpu.memory_space<vmem>>, vector<64x32xf32>
    %cst = arith.constant dense<0.000000e+00> : vector<64x32xf32>
    %2 = tpu.matmul %0, %1, %cst {dimension_numbers = #tpu.dot_dimension_numbers<[1], [0], [0], [1], [0, 0, 1, 1], [], []>, precision = #tpu.contract_precision<fp32>} : vector<64x64xf32>, vector<64x32xf32>, vector<64x32xf32> -> vector<64x32xf32>
    %c0_3 = arith.constant 0 : index
    %c0_4 = arith.constant 0 : index
    %3 = vector.load %arg2[%c0_3, %c0_4] : memref<32x128xf32, #tpu.memory_space<vmem>>, vector<32x128xf32>
    %cst_5 = arith.constant dense<0.000000e+00> : vector<64x128xf32>
    %4 = tpu.matmul %2, %3, %cst_5 {dimension_numbers = #tpu.dot_dimension_numbers<[1], [0], [0], [1], [0, 0, 1, 1], [], []>, precision = #tpu.contract_precision<fp32>} : vector<64x32xf32>, vector<32x128xf32>, vector<64x128xf32> -> vector<64x128xf32>
    %c0_6 = arith.constant 0 : index
    %c0_7 = arith.constant 0 : index
    %5 = vector.load %arg3[%c0_6, %c0_7] : memref<1x128xf32, #tpu.memory_space<vmem>>, vector<1x128xf32>
    %6 = vector.broadcast %5 : vector<1x128xf32> to vector<64x128xf32>
    %7 = arith.addf %4, %6 : vector<64x128xf32>
    %cst_8 = arith.constant 0.000000e+00 : f32
    %8 = vector.broadcast %cst_8 : f32 to vector<64x128xf32>
    %9 = arith.maximumf %7, %8 : vector<64x128xf32>
    %10 = vector.extract_strided_slice %9 {offsets = [0, 0], sizes = [16, 32], strides = [1, 1]} : vector<64x128xf32> to vector<16x32xf32>
    %c0_9 = arith.constant 0 : index
    %c0_10 = arith.constant 0 : index
    %c0_11 = arith.constant 0 : index
    %11 = vector.load %arg4[%c0_9, %c0_10, %c0_11] : memref<4x16x32xf32, #tpu.memory_space<vmem>>, vector<1x16x32xf32>
    %12 = vector.shape_cast %11 : vector<1x16x32xf32> to vector<16x32xf32>
    %13 = vector.shape_cast %10 : vector<16x32xf32> to vector<1x16x32xf32>
    tpu.vector_store %arg4[%c0_9, %c0_10, %c0_11], %13 {strides = array<i32>} : memref<4x16x32xf32, #tpu.memory_space<vmem>>, vector<1x16x32xf32>,
    %14 = vector.extract_strided_slice %9 {offsets = [16, 32], sizes = [16, 32], strides = [1, 1]} : vector<64x128xf32> to vector<16x32xf32>
    %c1 = arith.constant 1 : index
    %c0_12 = arith.constant 0 : index
    %c0_13 = arith.constant 0 : index
    %15 = vector.load %arg4[%c1, %c0_12, %c0_13] : memref<4x16x32xf32, #tpu.memory_space<vmem>>, vector<1x16x32xf32>
    %16 = vector.shape_cast %15 : vector<1x16x32xf32> to vector<16x32xf32>
    %17 = vector.shape_cast %14 : vector<16x32xf32> to vector<1x16x32xf32>
    tpu.vector_store %arg4[%c1, %c0_12, %c0_13], %17 {strides = array<i32>} : memref<4x16x32xf32, #tpu.memory_space<vmem>>, vector<1x16x32xf32>,
    %18 = vector.extract_strided_slice %9 {offsets = [32, 64], sizes = [16, 32], strides = [1, 1]} : vector<64x128xf32> to vector<16x32xf32>
    %c2 = arith.constant 2 : index
    %c0_14 = arith.constant 0 : index
    %c0_15 = arith.constant 0 : index
    %19 = vector.load %arg4[%c2, %c0_14, %c0_15] : memref<4x16x32xf32, #tpu.memory_space<vmem>>, vector<1x16x32xf32>
    %20 = vector.shape_cast %19 : vector<1x16x32xf32> to vector<16x32xf32>
    %21 = vector.shape_cast %18 : vector<16x32xf32> to vector<1x16x32xf32>
    tpu.vector_store %arg4[%c2, %c0_14, %c0_15], %21 {strides = array<i32>} : memref<4x16x32xf32, #tpu.memory_space<vmem>>, vector<1x16x32xf32>,
    %22 = vector.extract_strided_slice %9 {offsets = [48, 96], sizes = [16, 32], strides = [1, 1]} : vector<64x128xf32> to vector<16x32xf32>
    %c3 = arith.constant 3 : index
    %c0_16 = arith.constant 0 : index
    %c0_17 = arith.constant 0 : index
    %23 = vector.load %arg4[%c3, %c0_16, %c0_17] : memref<4x16x32xf32, #tpu.memory_space<vmem>>, vector<1x16x32xf32>
    %24 = vector.shape_cast %23 : vector<1x16x32xf32> to vector<16x32xf32>
    %25 = vector.shape_cast %22 : vector<16x32xf32> to vector<1x16x32xf32>
    tpu.vector_store %arg4[%c3, %c0_16, %c0_17], %25 {strides = array<i32>} : memref<4x16x32xf32, #tpu.memory_space<vmem>>, vector<1x16x32xf32>,
    return
  }
}

</mosaic_0001>

<llo_original>
// kernel: tpu_custom_call.1
$region0: #{tpu_custom_call.1}
  #allocation0 [shape = 'u32[]', space=smem, size = 0x4, offset = 0x4, fixed_abs, tag = 'smem constant byte address 0x4 - core index']
  #allocation1 [shape = 'u32[144,128]{1,0:T(1,128)}', space=vmem, size = 0x12000, scoped, tag = 'internal scratch']
  %s0 = inlined_call_operand.vmem [shape: f32[64,64], index: 0, kind: input, shape index: {}]
  %s1 = inlined_call_operand.vmem [shape: f32[64,32], index: 1, kind: input, shape index: {}]
  %s2 = inlined_call_operand.vmem [shape: f32[32,128], index: 2, kind: input, shape index: {}]
  %s3 = inlined_call_operand.vmem [shape: f32[1,128], index: 3, kind: input, shape index: {}]
  %s4 = inlined_call_operand.hbm [shape: f32[4,16,32], index: 4, kind: output, shape index: {}]
  %s5 = sld [smem:[#allocation0]]
  $region26: #{tpu_custom_call.1} parent=0
    _
  %s7 = ssub.s32 1, %s5
  %s8 = scalar_select 0, %s7, %s5
  $region1: #{tpu_custom_call.1} parent=0
    #allocation2 [shape = 'u8[32768]{0}', space=vmem, size = 0x8000, scoped, tag = 'output window, operand 0, single buffered']
    #allocation3 [shape = 's32[1]{0}', space=sflag, size = 0x4, scoped, tag = 'scoped memory for tpu_custom_call.1']
    %9 = vsyncpa [#allocation3], 0
    // Predicated region
    $region2: #{tpu_custom_call.1} parent=1 // pred_check
      _
    $region3: #{tpu_custom_call.1} parent=1 // pred_check_branch
      %11 = sbr.rel (0) target = $region5
    $region4: #{tpu_custom_call.1} parent=1 // pred_region
      _
    $region5: #{tpu_custom_call.1} parent=1 // pred_fallthru
      _
    // Predicated region
    $region6: #{tpu_custom_call.1} parent=1 // pred_check
      _
    $region7: #{tpu_custom_call.1} parent=1 // pred_check_branch
      %13 = sbr.rel (0) target = $region9
    $region8: #{tpu_custom_call.1} parent=1 // pred_region
      _
    $region9: #{tpu_custom_call.1} parent=1 // pred_fallthru
      _
    // Predicated region
    $region10: #{tpu_custom_call.1} parent=1 // pred_check
      _
    $region11: #{tpu_custom_call.1} parent=1 // pred_check_branch
      %15 = sbr.rel (0) target = $region13
    $region12: #{tpu_custom_call.1} parent=1 // pred_region
      _
    $region13: #{tpu_custom_call.1} parent=1 // pred_fallthru
      _
    // Predicated region
    $region14: #{tpu_custom_call.1} parent=1 // pred_check
      _
    $region15: #{tpu_custom_call.1} parent=1 // pred_check_branch
      %17 = sbr.rel (0) target = $region17
    $region16: #{tpu_custom_call.1} parent=1 // pred_region
      _
    $region17: #{tpu_custom_call.1} parent=1 // pred_fallthru
      _
    %v18 = vld [vmem:[%s0] sm:$0xff]
    %v19 = vld [vmem:[%s0 + $0x8] sm:$0xff]
    %v20 = vld [vmem:[%s0 + $0x10] sm:$0xff]
    %v21 = vld [vmem:[%s0 + $0x18] sm:$0xff]
    %v22 = vld [vmem:[%s0 + $0x20] sm:$0xff]
    %v23 = vld [vmem:[%s0 + $0x28] sm:$0xff]
    %v24 = vld [vmem:[%s0 + $0x30] sm:$0xff]
    %v25 = vld [vmem:[%s0 + $0x38] sm:$0xff]
    %v26 = vld [vmem:[%s1] sm:$0xff]
    %v27 = vld [vmem:[%s1 + $0x8] sm:$0xff]
    %v28 = vld [vmem:[%s1 + $0x10] sm:$0xff]
    %v29 = vld [vmem:[%s1 + $0x18] sm:$0xff]
    %v30 = vld [vmem:[%s1 + $0x20] sm:$0xff]
    %v31 = vld [vmem:[%s1 + $0x28] sm:$0xff]
    %v32 = vld [vmem:[%s1 + $0x30] sm:$0xff]
    %v33 = vld [vmem:[%s1 + $0x38] sm:$0xff]
    %vm34 = vcmask 523264
    %v36 = vsel %vm34, %v18, 0
    %v39 = vsel %vm34, %v19, 0
    %v42 = vsel %vm34, %v20, 0
    %v45 = vsel %vm34, %v21, 0
    %v48 = vsel %vm34, %v22, 0
    %v51 = vsel %vm34, %v23, 0
    %v54 = vsel %vm34, %v24, 0
    %v57 = vsel %vm34, %v25, 0
    %59 = vmatprep.subr.mxu0 0.0
    %v60 = vand.u32 %v26, 4294901760
    %61 = vmatpush1.msra.mxu0 %v60
    %62 = vmatprep.subr.mxu0 0.0
    %v63 = vand.u32 %v27, 4294901760
    %64 = vmatpush1.msra.mxu0 %v63
    %65 = vmatprep.subr.mxu0 0.0
    %v66 = vand.u32 %v28, 4294901760
    %67 = vmatpush1.msra.mxu0 %v66
    %68 = vmatprep.subr.mxu0 0.0
    %v69 = vand.u32 %v29, 4294901760
    %70 = vmatpush1.msra.mxu0 %v69
    %71 = vmatprep.subr.mxu0 0.0
    %v72 = vand.u32 %v30, 4294901760
    %73 = vmatpush1.msra.mxu0 %v72
    %74 = vmatprep.subr.mxu0 0.0
    %v75 = vand.u32 %v31, 4294901760
    %76 = vmatpush1.msra.mxu0 %v75
    %77 = vmatprep.subr.mxu0 0.0
    %v78 = vand.u32 %v32, 4294901760
    %79 = vmatpush1.msra.mxu0 %v78
    %80 = vmatprep.subr.mxu0 0.0
    %v81 = vand.u32 %v33, 4294901760
    %82 = vmatpush1.msra.mxu0 %v81
    %83 = vmatprep.subr.mxu0 0.0
    %84 = vmatpush1.msra.mxu0 0.0
    %85 = vmatprep.subr.mxu0 0.0
    %86 = vmatpush1.msra.mxu0 0.0
    %87 = vmatprep.subr.mxu0 0.0
    %88 = vmatpush1.msra.mxu0 0.0
    %89 = vmatprep.subr.mxu0 0.0
    %90 = vmatpush1.msra.mxu0 0.0
    %91 = vmatprep.subr.mxu0 0.0
    %92 = vmatpush1.msra.mxu0 0.0
    %93 = vmatprep.subr.mxu0 0.0
    %94 = vmatpush1.msra.mxu0 0.0
    %95 = vmatprep.subr.mxu0 0.0
    %96 = vmatpush1.msra.mxu0 0.0
    %97 = vmatprep.subr.mxu0 0.0
    %98 = vmatpush1.msra.mxu0 0.0
    %99 = vmatprep.subr.mxu0 0.0
    %100 = vmatpush1.msra.mxu0 0.0
    %101 = vmatprep.subr.mxu0 0.0
    %102 = vmatpush1.msra.mxu0 0.0
    %103 = vmatprep.subr.mxu0 0.0
    %104 = vmatpush1.msra.mxu0 0.0
    %105 = vmatprep.subr.mxu0 0.0
    %106 = vmatpush1.msra.mxu0 0.0
    %107 = vmatprep.subr.mxu0 0.0
    %108 = vmatpush1.msra.mxu0 0.0
    %109 = vmatprep.subr.mxu0 0.0
    %110 = vmatpush1.msra.mxu0 0.0
    %111 = vmatprep.subr.mxu0 0.0
    %112 = vmatpush1.msra.mxu0 0.0
    %113 = vmatprep.subr.mxu0 0.0
    %114 = vmatpush1.msra.mxu0 0.0
    %115 = vmatprep.subr.mxu0 0.0
    %116 = vmatpush1.msra.mxu0 0.0
    %117 = vmatprep.subr.mxu0 0.0
    %118 = vmatpush1.msra.mxu0 0.0
    %119 = vmatprep.subr.mxu0 0.0
    %120 = vmatpush1.msra.mxu0 0.0
    %121 = vmatprep.subr.mxu0 0.0
    %122 = vmatpush1.msra.mxu0 0.0
    %123 = vmatprep.subr.mxu0 0.0
    %124 = vmatpush1.msra.mxu0 0.0
    %125 = vmatprep.subr.mxu0 0.0
    %126 = vmatpush1.msra.mxu0 0.0
    %127 = vmatprep.subr.mxu0 0.0
    %128 = vmatpush1.msra.mxu0 0.0
    %129 = vmatprep.subr.mxu0 0.0
    %130 = vmatpush1.msra.mxu0 0.0
    %131 = vmatprep.mubr.f32.mxu0 0.0
    %v132 = vand.u32 %v36, 4294901760
    %v133 = vsub.f32 %v36, %v132
    %v134 = vand.u32 %v133, 4294901760
    %v135 = vsub.f32 %v133, %v134
    %v136 = vand.u32 %v135, 4294901760
    %137 = vmatmul.mubr.f32.gmra.mrb[0].mxu0 %v136
    %v138 = vpop.f32.mrb[0].mxu0
    %v139 = vadd.f32 0.0, %v138
    %v140 = vpop.f32.mrb[0].mxu0
    %141 = vmatprep.mubr.f32.mxu0 0.0
    %v142 = vand.u32 %v39, 4294901760
    %v143 = vsub.f32 %v39, %v142
    %v144 = vand.u32 %v143, 4294901760
    %v145 = vsub.f32 %v143, %v144
    %v146 = vand.u32 %v145, 4294901760
    %147 = vmatmul.mubr.f32.gmra.mrb[0].mxu0 %v146
    %v148 = vpop.f32.mrb[0].mxu0
    %v149 = vadd.f32 0.0, %v148
    %v150 = vpop.f32.mrb[0].mxu0
    %151 = vmatprep.mubr.f32.mxu0 0.0
    %v152 = vand.u32 %v42, 4294901760
    %v153 = vsub.f32 %v42, %v152
    %v154 = vand.u32 %v153, 4294901760
    %v155 = vsub.f32 %v153, %v154
    %v156 = vand.u32 %v155, 4294901760
    %157 = vmatmul.mubr.f32.gmra.mrb[0].mxu0 %v156
    %v158 = vpop.f32.mrb[0].mxu0
    %v159 = vadd.f32 0.0, %v158
    %v160 = vpop.f32.mrb[0].mxu0
    %161 = vmatprep.mubr.f32.mxu0 0.0
    %v162 = vand.u32 %v45, 4294901760
    %v163 = vsub.f32 %v45, %v162
    %v164 = vand.u32 %v163, 4294901760
    %v165 = vsub.f32 %v163, %v164
    %v166 = vand.u32 %v165, 4294901760
    %167 = vmatmul.mubr.f32.gmra.mrb[0].mxu0 %v166
    %v168 = vpop.f32.mrb[0].mxu0
    %v169 = vadd.f32 0.0, %v168
    %v170 = vpop.f32.mrb[0].mxu0
    %171 = vmatprep.mubr.f32.mxu0 0.0
    %v172 = vand.u32 %v48, 4294901760
    %v173 = vsub.f32 %v48, %v172
    %v174 = vand.u32 %v173, 4294901760
    %v175 = vsub.f32 %v173, %v174
    %v176 = vand.u32 %v175, 4294901760
    %177 = vmatmul.mubr.f32.gmra.mrb[0].mxu0 %v176
    %v178 = vpop.f32.mrb[0].mxu0
    %v179 = vadd.f32 0.0, %v178
    %v180 = vpop.f32.mrb[0].mxu0
    %181 = vmatprep.mubr.f32.mxu0 0.0
    %v182 = vand.u32 %v51, 4294901760
    %v183 = vsub.f32 %v51, %v182
    %v184 = vand.u32 %v183, 4294901760
    %v185 = vsub.f32 %v183, %v184
    %v186 = vand.u32 %v185, 4294901760
    %187 = vmatmul.mubr.f32.gmra.mrb[0].mxu0 %v186
    %v188 = vpop.f32.mrb[0].mxu0
    %v189 = vadd.f32 0.0, %v188
    %v190 = vpop.f32.mrb[0].mxu0
    %191 = vmatprep.mubr.f32.mxu0 0.0
    %v192 = vand.u32 %v54, 4294901760
    %v193 = vsub.f32 %v54, %v192
    %v194 = vand.u32 %v193, 4294901760
    %v195 = vsub.f32 %v193, %v194
    %v196 = vand.u32 %v195, 4294901760
    %197 = vmatmul.mubr.f32.gmra.mrb[0].mxu0 %v196
    %v198 = vpop.f32.mrb[0].mxu0
    %v199 = vadd.f32 0.0, %v198
    %v200 = vpop.f32.mrb[0].mxu0
    %201 = vmatprep.mubr.f32.mxu0 0.0
    %v202 = vand.u32 %v57, 4294901760
    %v203 = vsub.f32 %v57, %v202
    %v204 = vand.u32 %v203, 4294901760
    %v205 = vsub.f32 %v203, %v204
    %v206 = vand.u32 %v205, 4294901760
    %207 = vmatmul.mubr.f32.gmra.mrb[0].mxu0 %v206
    %v208 = vpop.f32.mrb[0].mxu0
    %v209 = vadd.f32 0.0, %v208
    %v210 = vpop.f32.mrb[0].mxu0
    %211 = vdwg.mxu0
    %212 = vmatprep.subr.mxu0 0.0
    %v213 = vand.u32 %v26, 4294901760
    %v214 = vsub.f32 %v26, %v213
    %v215 = vand.u32 %v214, 4294901760
    %v216 = vsub.f32 %v214, %v215
    %v217 = vand.u32 %v216, 4294901760
    %218 = vmatpush1.msra.mxu0 %v217
    %219 = vmatprep.subr.mxu0 0.0
    %v220 = vand.u32 %v27, 4294901760
    %v221 = vsub.f32 %v27, %v220
    %v222 = vand.u32 %v221, 4294901760
    %v223 = vsub.f32 %v221, %v222
    %v224 = vand.u32 %v223, 4294901760
    %225 = vmatpush1.msra.mxu0 %v224
    %226 = vmatprep.subr.mxu0 0.0
    %v227 = vand.u32 %v28, 4294901760
    %v228 = vsub.f32 %v28, %v227
    %v229 = vand.u32 %v228, 4294901760
    %v230 = vsub.f32 %v228, %v229
    %v231 = vand.u32 %v230, 4294901760
    %232 = vmatpush1.msra.mxu0 %v231
    %233 = vmatprep.subr.mxu0 0.0
    %v234 = vand.u32 %v29, 4294901760
    %v235 = vsub.f32 %v29, %v234
    %v236 = vand.u32 %v235, 4294901760
    %v237 = vsub.f32 %v235, %v236
    %v238 = vand.u32 %v237, 4294901760
    %239 = vmatpush1.msra.mxu0 %v238
    %240 = vmatprep.subr.mxu0 0.0
    %v241 = vand.u32 %v30, 4294901760
    %v242 = vsub.f32 %v30, %v241
    %v243 = vand.u32 %v242, 4294901760
    %v244 = vsub.f32 %v242, %v243
    %v245 = vand.u32 %v244, 4294901760
    %246 = vmatpush1.msra.mxu0 %v245
    %247 = vmatprep.subr.mxu0 0.0
    %v248 = vand.u32 %v31, 4294901760
    %v249 = vsub.f32 %v31, %v248
    %v250 = vand.u32 %v249, 4294901760
    %v251 = vsub.f32 %v249, %v250
    %v252 = vand.u32 %v251, 4294901760
    %253 = vmatpush1.msra.mxu0 %v252
    %254 = vmatprep.subr.mxu0 0.0
    %v255 = vand.u32 %v32, 4294901760
    %v256 = vsub.f32 %v32, %v255
    %v257 = vand.u32 %v256, 4294901760
    %v258 = vsub.f32 %v256, %v257
    %v259 = vand.u32 %v258, 4294901760
    %260 = vmatpush1.msra.mxu0 %v259
    %261 = vmatprep.subr.mxu0 0.0
    %v262 = vand.u32 %v33, 4294901760
    %v263 = vsub.f32 %v33, %v262
    %v264 = vand.u32 %v263, 4294901760
    %v265 = vsub.f32 %v263, %v264
    %v266 = vand.u32 %v265, 4294901760
    %267 = vmatpush1.msra.mxu0 %v266
    %268 = vmatprep.subr.mxu0 0.0
    %269 = vmatpush1.msra.mxu0 0.0
    %270 = vmatprep.subr.mxu0 0.0
    %271 = vmatpush1.msra.mxu0 0.0
    %272 = vmatprep.subr.mxu0 0.0
    %273 = vmatpush1.msra.mxu0 0.0
    %274 = vmatprep.subr.mxu0 0.0
    %275 = vmatpush1.msra.mxu0 0.0
    %276 = vmatprep.subr.mxu0 0.0
    %277 = vmatpush1.msra.mxu0 0.0
    %278 = vmatprep.subr.mxu0 0.0
    %279 = vmatpush1.msra.mxu0 0.0
    %280 = vmatprep.subr.mxu0 0.0
    %281 = vmatpush1.msra.mxu0 0.0
    %282 = vmatprep.subr.mxu0 0.0
    %283 = vmatpush1.msra.mxu0 0.0
    %284 = vmatprep.subr.mxu0 0.0
    %285 = vmatpush1.msra.mxu0 0.0
    %286 = vmatprep.subr.mxu0 0.0
    %287 = vmatpush1.msra.mxu0 0.0
    %288 = vmatprep.subr.mxu0 0.0
    %289 = vmatpush1.msra.mxu0 0.0
    %290 = vmatprep.subr.mxu0 0.0
    %291 = vmatpush1.msra.mxu0 0.0
    %292 = vmatprep.subr.mxu0 0.0
    %293 = vmatpush1.msra.mxu0 0.0
    %294 = vmatprep.subr.mxu0 0.0
    %295 = vmatpush1.msra.mxu0 0.0
    %296 = vmatprep.subr.mxu0 0.0
    %297 = vmatpush1.msra.mxu0 0.0
    %298 = vmatprep.subr.mxu0 0.0
    %299 = vmatpush1.msra.mxu0 0.0
    %300 = vmatprep.subr.mxu0 0.0
    %301 = vmatpush1.msra.mxu0 0.0
    %302 = vmatprep.subr.mxu0 0.0
    %303 = vmatpush1.msra.mxu0 0.0
    %304 = vmatprep.subr.mxu0 0.0
    %305 = vmatpush1.msra.mxu0 0.0
    %306 = vmatprep.subr.mxu0 0.0
    %307 = vmatpush1.msra.mxu0 0.0
    %308 = vmatprep.subr.mxu0 0.0
    %309 = vmatpush1.msra.mxu0 0.0
    %310 = vmatprep.subr.mxu0 0.0
    %311 = vmatpush1.msra.mxu0 0.0
    %312 = vmatprep.subr.mxu0 0.0
    %313 = vmatpush1.msra.mxu0 0.0
    %314 = vmatprep.subr.mxu0 0.0
    %315 = vmatpush1.msra.mxu0 0.0
    %316 = vmatprep.mubr.f32.mxu0 0.0
    %v317 = vand.u32 %v36, 4294901760
    %318 = vmatmul.mubr.f32.gmra.mrb[0].mxu0 %v317
    %v319 = vpop.f32.mrb[0].mxu0
    %v320 = vadd.f32 %v139, %v319
    %v321 = vpop.f32.mrb[0].mxu0
    %322 = vmatprep.mubr.f32.mxu0 0.0
    %v323 = vand.u32 %v39, 4294901760
    %324 = vmatmul.mubr.f32.gmra.mrb[0].mxu0 %v323
    %v325 = vpop.f32.mrb[0].mxu0
    %v326 = vadd.f32 %v149, %v325
    %v327 = vpop.f32.mrb[0].mxu0
    %328 = vmatprep.mubr.f32.mxu0 0.0
    %v329 = vand.u32 %v42, 4294901760
    %330 = vmatmul.mubr.f32.gmra.mrb[0].mxu0 %v329
    %v331 = vpop.f32.mrb[0].mxu0
    %v332 = vadd.f32 %v159, %v331
    %v333 = vpop.f32.mrb[0].mxu0
    %334 = vmatprep.mubr.f32.mxu0 0.0
    %v335 = vand.u32 %v45, 4294901760
    %336 = vmatmul.mubr.f32.gmra.mrb[0].mxu0 %v335
    %v337 = vpop.f32.mrb[0].mxu0
    %v338 = vadd.f32 %v169, %v337
    %v339 = vpop.f32.mrb[0].mxu0
    %340 = vmatprep.mubr.f32.mxu0 0.0
    %v341 = vand.u32 %v48, 4294901760
    %342 = vmatmul.mubr.f32.gmra.mrb[0].mxu0 %v341
    %v343 = vpop.f32.mrb[0].mxu0
    %v344 = vadd.f32 %v179, %v343
    %v345 = vpop.f32.mrb[0].mxu0
    %346 = vmatprep.mubr.f32.mxu0 0.0
    %v347 = vand.u32 %v51, 4294901760
    %348 = vmatmul.mubr.f32.gmra.mrb[0].mxu0 %v347
    %v349 = vpop.f32.mrb[0].mxu0
    %v350 = vadd.f32 %v189, %v349
    %v351 = vpop.f32.mrb[0].mxu0
    %352 = vmatprep.mubr.f32.mxu0 0.0
    %v353 = vand.u32 %v54, 4294901760
    %354 = vmatmul.mubr.f32.gmra.mrb[0].mxu0 %v353
    %v355 = vpop.f32.mrb[0].mxu0
    %v356 = vadd.f32 %v199, %v355
    %v357 = vpop.f32.mrb[0].mxu0
    %358 = vmatprep.mubr.f32.mxu0 0.0
    %v359 = vand.u32 %v57, 4294901760
    %360 = vmatmul.mubr.f32.gmra.mrb[0].mxu0 %v359
    %v361 = vpop.f32.mrb[0].mxu0
    %v362 = vadd.f32 %v209, %v361
    %v363 = vpop.f32.mrb[0].mxu0
    %364 = vdwg.mxu0
    %365 = vmatprep.subr.mxu0 0.0
    %v366 = vand.u32 %v26, 4294901760
    %v367 = vsub.f32 %v26, %v366
    %368 = vmatpush1.msra.mxu0 %v367
    %369 = vmatprep.subr.mxu0 0.0
    %v370 = vand.u32 %v27, 4294901760
    %v371 = vsub.f32 %v27, %v370
    %372 = vmatpush1.msra.mxu0 %v371
    %373 = vmatprep.subr.mxu0 0.0
    %v374 = vand.u32 %v28, 4294901760
    %v375 = vsub.f32 %v28, %v374
    %376 = vmatpush1.msra.mxu0 %v375
    %377 = vmatprep.subr.mxu0 0.0
    %v378 = vand.u32 %v29, 4294901760
    %v379 = vsub.f32 %v29, %v378
    %380 = vmatpush1.msra.mxu0 %v379
    %381 = vmatprep.subr.mxu0 0.0
    %v382 = vand.u32 %v30, 4294901760
    %v383 = vsub.f32 %v30, %v382
    %384 = vmatpush1.msra.mxu0 %v383
    %385 = vmatprep.subr.mxu0 0.0
    %v386 = vand.u32 %v31, 4294901760
    %v387 = vsub.f32 %v31, %v386
    %388 = vmatpush1.msra.mxu0 %v387
    %389 = vmatprep.subr.mxu0 0.0
    %v390 = vand.u32 %v32, 4294901760
    %v391 = vsub.f32 %v32, %v390
    %392 = vmatpush1.msra.mxu0 %v391
    %393 = vmatprep.subr.mxu0 0.0
    %v394 = vand.u32 %v33, 4294901760
    %v395 = vsub.f32 %v33, %v394
    %396 = vmatpush1.msra.mxu0 %v395
    %397 = vmatprep.subr.mxu0 0.0
    %398 = vmatpush1.msra.mxu0 0.0
    %399 = vmatprep.subr.mxu0 0.0
    %400 = vmatpush1.msra.mxu0 0.0
    %401 = vmatprep.subr.mxu0 0.0
    %402 = vmatpush1.msra.mxu0 0.0
    %403 = vmatprep.subr.mxu0 0.0
    %404 = vmatpush1.msra.mxu0 0.0
    %405 = vmatprep.subr.mxu0 0.0
    %406 = vmatpush1.msra.mxu0 0.0
    %407 = vmatprep.subr.mxu0 0.0
    %408 = vmatpush1.msra.mxu0 0.0
    %409 = vmatprep.subr.mxu0 0.0
    %410 = vmatpush1.msra.mxu0 0.0
    %411 = vmatprep.subr.mxu0 0.0
    %412 = vmatpush1.msra.mxu0 0.0
    %413 = vmatprep.subr.mxu0 0.0
    %414 = vmatpush1.msra.mxu0 0.0
    %415 = vmatprep.subr.mxu0 0.0
    %416 = vmatpush1.msra.mxu0 0.0
    %417 = vmatprep.subr.mxu0 0.0
    %418 = vmatpush1.msra.mxu0 0.0
    %419 = vmatprep.subr.mxu0 0.0
    %420 = vmatpush1.msra.mxu0 0.0
    %421 = vmatprep.subr.mxu0 0.0
    %422 = vmatpush1.msra.mxu0 0.0
    %423 = vmatprep.subr.mxu0 0.0
    %424 = vmatpush1.msra.mxu0 0.0
    %425 = vmatprep.subr.mxu0 0.0
    %426 = vmatpush1.msra.mxu0 0.0
    %427 = vmatprep.subr.mxu0 0.0
    %428 = vmatpush1.msra.mxu0 0.0
    %429 = vmatprep.subr.mxu0 0.0
    %430 = vmatpush1.msra.mxu0 0.0
    %431 = vmatprep.subr.mxu0 0.0
    %432 = vmatpush1.msra.mxu0 0.0
    %433 = vmatprep.subr.mxu0 0.0
    %434 = vmatpush1.msra.mxu0 0.0
    %435 = vmatprep.subr.mxu0 0.0
    %436 = vmatpush1.msra.mxu0 0.0
    %437 = vmatprep.subr.mxu0 0.0
    %438 = vmatpush1.msra.mxu0 0.0
    %439 = vmatprep.subr.mxu0 0.0
    %440 = vmatpush1.msra.mxu0 0.0
    %441 = vmatprep.subr.mxu0 0.0
    %442 = vmatpush1.msra.mxu0 0.0
    %443 = vmatprep.subr.mxu0 0.0
    %444 = vmatpush1.msra.mxu0 0.0
    %445 = vmatprep.mubr.f32.mxu0 0.0
    %v446 = vand.u32 %v36, 4294901760
    %v447 = vsub.f32 %v36, %v446
    %448 = vmatmul.mubr.f32.gmra.mrb[0].mxu0 %v447
    %v449 = vpop.f32.mrb[0].mxu0
    %v450 = vadd.f32 %v320, %v449
    %v451 = vpop.f32.mrb[0].mxu0
    %452 = vmatprep.mubr.f32.mxu0 0.0
    %v453 = vand.u32 %v39, 4294901760
    %v454 = vsub.f32 %v39, %v453
    %455 = vmatmul.mubr.f32.gmra.mrb[0].mxu0 %v454
    %v456 = vpop.f32.mrb[0].mxu0
    %v457 = vadd.f32 %v326, %v456
    %v458 = vpop.f32.mrb[0].mxu0
    %459 = vmatprep.mubr.f32.mxu0 0.0
    %v460 = vand.u32 %v42, 4294901760
    %v461 = vsub.f32 %v42, %v460
    %462 = vmatmul.mubr.f32.gmra.mrb[0].mxu0 %v461
    %v463 = vpop.f32.mrb[0].mxu0
    %v464 = vadd.f32 %v332, %v463
    %v465 = vpop.f32.mrb[0].mxu0
    %466 = vmatprep.mubr.f32.mxu0 0.0
    %v467 = vand.u32 %v45, 4294901760
    %v468 = vsub.f32 %v45, %v467
    %469 = vmatmul.mubr.f32.gmra.mrb[0].mxu0 %v468
    %v470 = vpop.f32.mrb[0].mxu0
    %v471 = vadd.f32 %v338, %v470
    %v472 = vpop.f32.mrb[0].mxu0
    %473 = vmatprep.mubr.f32.mxu0 0.0
    %v474 = vand.u32 %v48, 4294901760
    %v475 = vsub.f32 %v48, %v474
    %476 = vmatmul.mubr.f32.gmra.mrb[0].mxu0 %v475
    %v477 = vpop.f32.mrb[0].mxu0
    %v478 = vadd.f32 %v344, %v477
    %v479 = vpop.f32.mrb[0].mxu0
    %480 = vmatprep.mubr.f32.mxu0 0.0
    %v481 = vand.u32 %v51, 4294901760
    %v482 = vsub.f32 %v51, %v481
    %483 = vmatmul.mubr.f32.gmra.mrb[0].mxu0 %v482
    %v484 = vpop.f32.mrb[0].mxu0
    %v485 = vadd.f32 %v350, %v484
    %v486 = vpop.f32.mrb[0].mxu0
    %487 = vmatprep.mubr.f32.mxu0 0.0
    %v488 = vand.u32 %v54, 4294901760
    %v489 = vsub.f32 %v54, %v488
    %490 = vmatmul.mubr.f32.gmra.mrb[0].mxu0 %v489
    %v491 = vpop.f32.mrb[0].mxu0
    %v492 = vadd.f32 %v356, %v491
    %v493 = vpop.f32.mrb[0].mxu0
    %494 = vmatprep.mubr.f32.mxu0 0.0
    %v495 = vand.u32 %v57, 4294901760
    %v496 = vsub.f32 %v57, %v495
    %497 = vmatmul.mubr.f32.gmra.mrb[0].mxu0 %v496
    %v498 = vpop.f32.mrb[0].mxu0
    %v499 = vadd.f32 %v362, %v498
    %v500 = vpop.f32.mrb[0].mxu0
    %501 = vdwg.mxu0
    %502 = vmatprep.subr.mxu0 0.0
    %v503 = vand.u32 %v26, 4294901760
    %504 = vmatpush1.msra.mxu0 %v503
    %505 = vmatprep.subr.mxu0 0.0
    %v506 = vand.u32 %v27, 4294901760
    %507 = vmatpush1.msra.mxu0 %v506
    %508 = vmatprep.subr.mxu0 0.0
    %v509 = vand.u32 %v28, 4294901760
    %510 = vmatpush1.msra.mxu0 %v509
    %511 = vmatprep.subr.mxu0 0.0
    %v512 = vand.u32 %v29, 4294901760
    %513 = vmatpush1.msra.mxu0 %v512
    %514 = vmatprep.subr.mxu0 0.0
    %v515 = vand.u32 %v30, 4294901760
    %516 = vmatpush1.msra.mxu0 %v515
    %517 = vmatprep.subr.mxu0 0.0
    %v518 = vand.u32 %v31, 4294901760
    %519 = vmatpush1.msra.mxu0 %v518
    %520 = vmatprep.subr.mxu0 0.0
    %v521 = vand.u32 %v32, 4294901760
    %522 = vmatpush1.msra.mxu0 %v521
    %523 = vmatprep.subr.mxu0 0.0
    %v524 = vand.u32 %v33, 4294901760
    %525 = vmatpush1.msra.mxu0 %v524
    %526 = vmatprep.subr.mxu0 0.0
    %527 = vmatpush1.msra.mxu0 0.0
    %528 = vmatprep.subr.mxu0 0.0
    %529 = vmatpush1.msra.mxu0 0.0
    %530 = vmatprep.subr.mxu0 0.0
    %531 = vmatpush1.msra.mxu0 0.0
    %532 = vmatprep.subr.mxu0 0.0
    %533 = vmatpush1.msra.mxu0 0.0
    %534 = vmatprep.subr.mxu0 0.0
    %535 = vmatpush1.msra.mxu0 0.0
    %536 = vmatprep.subr.mxu0 0.0
    %537 = vmatpush1.msra.mxu0 0.0
    %538 = vmatprep.subr.mxu0 0.0
    %539 = vmatpush1.msra.mxu0 0.0
    %540 = vmatprep.subr.mxu0 0.0
    %541 = vmatpush1.msra.mxu0 0.0
    %542 = vmatprep.subr.mxu0 0.0
    %543 = vmatpush1.msra.mxu0 0.0
    %544 = vmatprep.subr.mxu0 0.0
    %545 = vmatpush1.msra.mxu0 0.0
    %546 = vmatprep.subr.mxu0 0.0
    %547 = vmatpush1.msra.mxu0 0.0
    %548 = vmatprep.subr.mxu0 0.0
    %549 = vmatpush1.msra.mxu0 0.0
    %550 = vmatprep.subr.mxu0 0.0
    %551 = vmatpush1.msra.mxu0 0.0
    %552 = vmatprep.subr.mxu0 0.0
    %553 = vmatpush1.msra.mxu0 0.0
    %554 = vmatprep.subr.mxu0 0.0
    %555 = vmatpush1.msra.mxu0 0.0
    %556 = vmatprep.subr.mxu0 0.0
    %557 = vmatpush1.msra.mxu0 0.0
    %558 = vmatprep.subr.mxu0 0.0
    %559 = vmatpush1.msra.mxu0 0.0
    %560 = vmatprep.subr.mxu0 0.0
    %561 = vmatpush1.msra.mxu0 0.0
    %562 = vmatprep.subr.mxu0 0.0
    %563 = vmatpush1.msra.mxu0 0.0
    %564 = vmatprep.subr.mxu0 0.0
    %565 = vmatpush1.msra.mxu0 0.0
    %566 = vmatprep.subr.mxu0 0.0
    %567 = vmatpush1.msra.mxu0 0.0
    %568 = vmatprep.subr.mxu0 0.0
    %569 = vmatpush1.msra.mxu0 0.0
    %570 = vmatprep.subr.mxu0 0.0
    %571 = vmatpush1.msra.mxu0 0.0
    %572 = vmatprep.subr.mxu0 0.0
    %573 = vmatpush1.msra.mxu0 0.0
    %574 = vmatprep.mubr.f32.mxu0 0.0
    %v575 = vand.u32 %v36, 4294901760
    %v576 = vsub.f32 %v36, %v575
    %v577 = vand.u32 %v576, 4294901760
    %578 = vmatmul.mubr.f32.gmra.mrb[0].mxu0 %v577
    %v579 = vpop.f32.mrb[0].mxu0
    %v580 = vadd.f32 %v450, %v579
    %v581 = vpop.f32.mrb[0].mxu0
    %582 = vmatprep.mubr.f32.mxu0 0.0
    %v583 = vand.u32 %v39, 4294901760
    %v584 = vsub.f32 %v39, %v583
    %v585 = vand.u32 %v584, 4294901760
    %586 = vmatmul.mubr.f32.gmra.mrb[0].mxu0 %v585
    %v587 = vpop.f32.mrb[0].mxu0
    %v588 = vadd.f32 %v457, %v587
    %v589 = vpop.f32.mrb[0].mxu0
    %590 = vmatprep.mubr.f32.mxu0 0.0
    %v591 = vand.u32 %v42, 4294901760
    %v592 = vsub.f32 %v42, %v591
    %v593 = vand.u32 %v592, 4294901760
    %594 = vmatmul.mubr.f32.gmra.mrb[0].mxu0 %v593
    %v595 = vpop.f32.mrb[0].mxu0
    %v596 = vadd.f32 %v464, %v595
    %v597 = vpop.f32.mrb[0].mxu0
    %598 = vmatprep.mubr.f32.mxu0 0.0
    %v599 = vand.u32 %v45, 4294901760
    %v600 = vsub.f32 %v45, %v599
    %v601 = vand.u32 %v600, 4294901760
    %602 = vmatmul.mubr.f32.gmra.mrb[0].mxu0 %v601
    %v603 = vpop.f32.mrb[0].mxu0
    %v604 = vadd.f32 %v471, %v603
    %v605 = vpop.f32.mrb[0].mxu0
    %606 = vmatprep.mubr.f32.mxu0 0.0
    %v607 = vand.u32 %v48, 4294901760
    %v608 = vsub.f32 %v48, %v607
    %v609 = vand.u32 %v608, 4294901760
    %610 = vmatmul.mubr.f32.gmra.mrb[0].mxu0 %v609
    %v611 = vpop.f32.mrb[0].mxu0
    %v612 = vadd.f32 %v478, %v611
    %v613 = vpop.f32.mrb[0].mxu0
    %614 = vmatprep.mubr.f32.mxu0 0.0
    %v615 = vand.u32 %v51, 4294901760
    %v616 = vsub.f32 %v51, %v615
    %v617 = vand.u32 %v616, 4294901760
    %618 = vmatmul.mubr.f32.gmra.mrb[0].mxu0 %v617
    %v619 = vpop.f32.mrb[0].mxu0
    %v620 = vadd.f32 %v485, %v619
    %v621 = vpop.f32.mrb[0].mxu0
    %622 = vmatprep.mubr.f32.mxu0 0.0
    %v623 = vand.u32 %v54, 4294901760
    %v624 = vsub.f32 %v54, %v623
    %v625 = vand.u32 %v624, 4294901760
    %626 = vmatmul.mubr.f32.gmra.mrb[0].mxu0 %v625
    %v627 = vpop.f32.mrb[0].mxu0
    %v628 = vadd.f32 %v492, %v627
    %v629 = vpop.f32.mrb[0].mxu0
    %630 = vmatprep.mubr.f32.mxu0 0.0
    %v631 = vand.u32 %v57, 4294901760
    %v632 = vsub.f32 %v57, %v631
    %v633 = vand.u32 %v632, 4294901760
    %634 = vmatmul.mubr.f32.gmra.mrb[0].mxu0 %v633
    %v635 = vpop.f32.mrb[0].mxu0
    %v636 = vadd.f32 %v499, %v635
    %v637 = vpop.f32.mrb[0].mxu0
    %638 = vdwg.mxu0
    %639 = vmatprep.subr.mxu0 0.0
    %v640 = vand.u32 %v26, 4294901760
    %v641 = vsub.f32 %v26, %v640
    %v642 = vand.u32 %v641, 4294901760
    %643 = vmatpush1.msra.mxu0 %v642
    %644 = vmatprep.subr.mxu0 0.0
    %v645 = vand.u32 %v27, 4294901760
    %v646 = vsub.f32 %v27, %v645
    %v647 = vand.u32 %v646, 4294901760
    %648 = vmatpush1.msra.mxu0 %v647
    %649 = vmatprep.subr.mxu0 0.0
    %v650 = vand.u32 %v28, 4294901760
    %v651 = vsub.f32 %v28, %v650
    %v652 = vand.u32 %v651, 4294901760
    %653 = vmatpush1.msra.mxu0 %v652
    %654 = vmatprep.subr.mxu0 0.0
    %v655 = vand.u32 %v29, 4294901760
    %v656 = vsub.f32 %v29, %v655
    %v657 = vand.u32 %v656, 4294901760
    %658 = vmatpush1.msra.mxu0 %v657
    %659 = vmatprep.subr.mxu0 0.0
    %v660 = vand.u32 %v30, 4294901760
    %v661 = vsub.f32 %v30, %v660
    %v662 = vand.u32 %v661, 4294901760
    %663 = vmatpush1.msra.mxu0 %v662
    %664 = vmatprep.subr.mxu0 0.0
    %v665 = vand.u32 %v31, 4294901760
    %v666 = vsub.f32 %v31, %v665
    %v667 = vand.u32 %v666, 4294901760
    %668 = vmatpush1.msra.mxu0 %v667
    %669 = vmatprep.subr.mxu0 0.0
    %v670 = vand.u32 %v32, 4294901760
    %v671 = vsub.f32 %v32, %v670
    %v672 = vand.u32 %v671, 4294901760
    %673 = vmatpush1.msra.mxu0 %v672
    %674 = vmatprep.subr.mxu0 0.0
    %v675 = vand.u32 %v33, 4294901760
    %v676 = vsub.f32 %v33, %v675
    %v677 = vand.u32 %v676, 4294901760
    %678 = vmatpush1.msra.mxu0 %v677
    %679 = vmatprep.subr.mxu0 0.0
    %680 = vmatpush1.msra.mxu0 0.0
    %681 = vmatprep.subr.mxu0 0.0
    %682 = vmatpush1.msra.mxu0 0.0
    %683 = vmatprep.subr.mxu0 0.0
    %684 = vmatpush1.msra.mxu0 0.0
    %685 = vmatprep.subr.mxu0 0.0
    %686 = vmatpush1.msra.mxu0 0.0
    %687 = vmatprep.subr.mxu0 0.0
    %688 = vmatpush1.msra.mxu0 0.0
    %689 = vmatprep.subr.mxu0 0.0
    %690 = vmatpush1.msra.mxu0 0.0
    %691 = vmatprep.subr.mxu0 0.0
    %692 = vmatpush1.msra.mxu0 0.0
    %693 = vmatprep.subr.mxu0 0.0
    %694 = vmatpush1.msra.mxu0 0.0
    %695 = vmatprep.subr.mxu0 0.0
    %696 = vmatpush1.msra.mxu0 0.0
    %697 = vmatprep.subr.mxu0 0.0
    %698 = vmatpush1.msra.mxu0 0.0
    %699 = vmatprep.subr.mxu0 0.0
    %700 = vmatpush1.msra.mxu0 0.0
    %701 = vmatprep.subr.mxu0 0.0
    %702 = vmatpush1.msra.mxu0 0.0
    %703 = vmatprep.subr.mxu0 0.0
    %704 = vmatpush1.msra.mxu0 0.0
    %705 = vmatprep.subr.mxu0 0.0
    %706 = vmatpush1.msra.mxu0 0.0
    %707 = vmatprep.subr.mxu0 0.0
    %708 = vmatpush1.msra.mxu0 0.0
    %709 = vmatprep.subr.mxu0 0.0
    %710 = vmatpush1.msra.mxu0 0.0
    %711 = vmatprep.subr.mxu0 0.0
    %712 = vmatpush1.msra.mxu0 0.0
    %713 = vmatprep.subr.mxu0 0.0
    %714 = vmatpush1.msra.mxu0 0.0
    %715 = vmatprep.subr.mxu0 0.0
    %716 = vmatpush1.msra.mxu0 0.0
    %717 = vmatprep.subr.mxu0 0.0
    %718 = vmatpush1.msra.mxu0 0.0
    %719 = vmatprep.subr.mxu0 0.0
    %720 = vmatpush1.msra.mxu0 0.0
    %721 = vmatprep.subr.mxu0 0.0
    %722 = vmatpush1.msra.mxu0 0.0
    %723 = vmatprep.subr.mxu0 0.0
    %724 = vmatpush1.msra.mxu0 0.0
    %725 = vmatprep.subr.mxu0 0.0
    %726 = vmatpush1.msra.mxu0 0.0
    %727 = vmatprep.mubr.f32.mxu0 0.0
    %v728 = vand.u32 %v36, 4294901760
    %729 = vmatmul.mubr.f32.gmra.mrb[0].mxu0 %v728
    %v730 = vpop.f32.mrb[0].mxu0
    %v731 = vadd.f32 %v580, %v730
    %v732 = vpop.f32.mrb[0].mxu0
    %733 = vmatprep.mubr.f32.mxu0 0.0
    %v734 = vand.u32 %v39, 4294901760
    %735 = vmatmul.mubr.f32.gmra.mrb[0].mxu0 %v734
    %v736 = vpop.f32.mrb[0].mxu0
    %v737 = vadd.f32 %v588, %v736
    %v738 = vpop.f32.mrb[0].mxu0
    %739 = vmatprep.mubr.f32.mxu0 0.0
    %v740 = vand.u32 %v42, 4294901760
    %741 = vmatmul.mubr.f32.gmra.mrb[0].mxu0 %v740
    %v742 = vpop.f32.mrb[0].mxu0
    %v743 = vadd.f32 %v596, %v742
    %v744 = vpop.f32.mrb[0].mxu0
    %745 = vmatprep.mubr.f32.mxu0 0.0
    %v746 = vand.u32 %v45, 4294901760
    %747 = vmatmul.mubr.f32.gmra.mrb[0].mxu0 %v746
    %v748 = vpop.f32.mrb[0].mxu0
    %v749 = vadd.f32 %v604, %v748
    %v750 = vpop.f32.mrb[0].mxu0
    %751 = vmatprep.mubr.f32.mxu0 0.0
    %v752 = vand.u32 %v48, 4294901760
    %753 = vmatmul.mubr.f32.gmra.mrb[0].mxu0 %v752
    %v754 = vpop.f32.mrb[0].mxu0
    %v755 = vadd.f32 %v612, %v754
    %v756 = vpop.f32.mrb[0].mxu0
    %757 = vmatprep.mubr.f32.mxu0 0.0
    %v758 = vand.u32 %v51, 4294901760
    %759 = vmatmul.mubr.f32.gmra.mrb[0].mxu0 %v758
    %v760 = vpop.f32.mrb[0].mxu0
    %v761 = vadd.f32 %v620, %v760
    %v762 = vpop.f32.mrb[0].mxu0
    %763 = vmatprep.mubr.f32.mxu0 0.0
    %v764 = vand.u32 %v54, 4294901760
    %765 = vmatmul.mubr.f32.gmra.mrb[0].mxu0 %v764
    %v766 = vpop.f32.mrb[0].mxu0
    %v767 = vadd.f32 %v628, %v766
    %v768 = vpop.f32.mrb[0].mxu0
    %769 = vmatprep.mubr.f32.mxu0 0.0
    %v770 = vand.u32 %v57, 4294901760
    %771 = vmatmul.mubr.f32.gmra.mrb[0].mxu0 %v770
    %v772 = vpop.f32.mrb[0].mxu0
    %v773 = vadd.f32 %v636, %v772
    %v774 = vpop.f32.mrb[0].mxu0
    %775 = vdwg.mxu0
    %776 = vmatprep.subr.mxu0 0.0
    %v777 = vand.u32 %v26, 4294901760
    %778 = vmatpush1.msra.mxu0 %v777
    %779 = vmatprep.subr.mxu0 0.0
    %v780 = vand.u32 %v27, 4294901760
    %781 = vmatpush1.msra.mxu0 %v780
    %782 = vmatprep.subr.mxu0 0.0
    %v783 = vand.u32 %v28, 4294901760
    %784 = vmatpush1.msra.mxu0 %v783
    %785 = vmatprep.subr.mxu0 0.0
    %v786 = vand.u32 %v29, 4294901760
    %787 = vmatpush1.msra.mxu0 %v786
    %788 = vmatprep.subr.mxu0 0.0
    %v789 = vand.u32 %v30, 4294901760
    %790 = vmatpush1.msra.mxu0 %v789
    %791 = vmatprep.subr.mxu0 0.0
    %v792 = vand.u32 %v31, 4294901760
    %793 = vmatpush1.msra.mxu0 %v792
    %794 = vmatprep.subr.mxu0 0.0
    %v795 = vand.u32 %v32, 4294901760
    %796 = vmatpush1.msra.mxu0 %v795
    %797 = vmatprep.subr.mxu0 0.0
    %v798 = vand.u32 %v33, 4294901760
    %799 = vmatpush1.msra.mxu0 %v798
    %800 = vmatprep.subr.mxu0 0.0
    %801 = vmatpush1.msra.mxu0 0.0
    %802 = vmatprep.subr.mxu0 0.0
    %803 = vmatpush1.msra.mxu0 0.0
    %804 = vmatprep.subr.mxu0 0.0
    %805 = vmatpush1.msra.mxu0 0.0
    %806 = vmatprep.subr.mxu0 0.0
    %807 = vmatpush1.msra.mxu0 0.0
    %808 = vmatprep.subr.mxu0 0.0
    %809 = vmatpush1.msra.mxu0 0.0
    %810 = vmatprep.subr.mxu0 0.0
    %811 = vmatpush1.msra.mxu0 0.0
    %812 = vmatprep.subr.mxu0 0.0
    %813 = vmatpush1.msra.mxu0 0.0
    %814 = vmatprep.subr.mxu0 0.0
    %815 = vmatpush1.msra.mxu0 0.0
    %816 = vmatprep.subr.mxu0 0.0
    %817 = vmatpush1.msra.mxu0 0.0
    %818 = vmatprep.subr.mxu0 0.0
    %819 = vmatpush1.msra.mxu0 0.0
    %820 = vmatprep.subr.mxu0 0.0
    %821 = vmatpush1.msra.mxu0 0.0
    %822 = vmatprep.subr.mxu0 0.0
    %823 = vmatpush1.msra.mxu0 0.0
    %824 = vmatprep.subr.mxu0 0.0
    %825 = vmatpush1.msra.mxu0 0.0
    %826 = vmatprep.subr.mxu0 0.0
    %827 = vmatpush1.msra.mxu0 0.0
    %828 = vmatprep.subr.mxu0 0.0
    %829 = vmatpush1.msra.mxu0 0.0
    %830 = vmatprep.subr.mxu0 0.0
    %831 = vmatpush1.msra.mxu0 0.0
    %832 = vmatprep.subr.mxu0 0.0
    %833 = vmatpush1.msra.mxu0 0.0
    %834 = vmatprep.subr.mxu0 0.0
    %835 = vmatpush1.msra.mxu0 0.0
    %836 = vmatprep.subr.mxu0 0.0
    %837 = vmatpush1.msra.mxu0 0.0
    %838 = vmatprep.subr.mxu0 0.0
    %839 = vmatpush1.msra.mxu0 0.0
    %840 = vmatprep.subr.mxu0 0.0
    %841 = vmatpush1.msra.mxu0 0.0
    %842 = vmatprep.subr.mxu0 0.0
    %843 = vmatpush1.msra.mxu0 0.0
    %844 = vmatprep.subr.mxu0 0.0
    %845 = vmatpush1.msra.mxu0 0.0
    %846 = vmatprep.subr.mxu0 0.0
    %847 = vmatpush1.msra.mxu0 0.0
    %848 = vmatprep.mubr.f32.mxu0 0.0
    %v849 = vand.u32 %v36, 4294901760
    %850 = vmatmul.mubr.f32.gmra.mrb[0].mxu0 %v849
    %v851 = vpop.f32.mrb[0].mxu0
    %v852 = vadd.f32 %v731, %v851
    %v853 = vpop.f32.mrb[0].mxu0
    %854 = vmatprep.mubr.f32.mxu0 0.0
    %v855 = vand.u32 %v39, 4294901760
    %856 = vmatmul.mubr.f32.gmra.mrb[0].mxu0 %v855
    %v857 = vpop.f32.mrb[0].mxu0
    %v858 = vadd.f32 %v737, %v857
    %v859 = vpop.f32.mrb[0].mxu0
    %860 = vmatprep.mubr.f32.mxu0 0.0
    %v861 = vand.u32 %v42, 4294901760
    %862 = vmatmul.mubr.f32.gmra.mrb[0].mxu0 %v861
    %v863 = vpop.f32.mrb[0].mxu0
    %v864 = vadd.f32 %v743, %v863
    %v865 = vpop.f32.mrb[0].mxu0
    %866 = vmatprep.mubr.f32.mxu0 0.0
    %v867 = vand.u32 %v45, 4294901760
    %868 = vmatmul.mubr.f32.gmra.mrb[0].mxu0 %v867
    %v869 = vpop.f32.mrb[0].mxu0
    %v870 = vadd.f32 %v749, %v869
    %v871 = vpop.f32.mrb[0].mxu0
    %872 = vmatprep.mubr.f32.mxu0 0.0
    %v873 = vand.u32 %v48, 4294901760
    %874 = vmatmul.mubr.f32.gmra.mrb[0].mxu0 %v873
    %v875 = vpop.f32.mrb[0].mxu0
    %v876 = vadd.f32 %v755, %v875
    %v877 = vpop.f32.mrb[0].mxu0
    %878 = vmatprep.mubr.f32.mxu0 0.0
    %v879 = vand.u32 %v51, 4294901760
    %880 = vmatmul.mubr.f32.gmra.mrb[0].mxu0 %v879
    %v881 = vpop.f32.mrb[0].mxu0
    %v882 = vadd.f32 %v761, %v881
    %v883 = vpop.f32.mrb[0].mxu0
    %884 = vmatprep.mubr.f32.mxu0 0.0
    %v885 = vand.u32 %v54, 4294901760
    %886 = vmatmul.mubr.f32.gmra.mrb[0].mxu0 %v885
    %v887 = vpop.f32.mrb[0].mxu0
    %v888 = vadd.f32 %v767, %v887
    %v889 = vpop.f32.mrb[0].mxu0
    %890 = vmatprep.mubr.f32.mxu0 0.0
    %v891 = vand.u32 %v57, 4294901760
    %892 = vmatmul.mubr.f32.gmra.mrb[0].mxu0 %v891
    %v893 = vpop.f32.mrb[0].mxu0
    %v894 = vadd.f32 %v773, %v893
    %v895 = vpop.f32.mrb[0].mxu0
    %896 = vdwg.mxu0
    %v897 = vld [vmem:[%s2] sm:$0xff]
    %v898 = vld [vmem:[%s2 + $0x8] sm:$0xff]
    %v899 = vld [vmem:[%s2 + $0x10] sm:$0xff]
    %v900 = vld [vmem:[%s2 + $0x18] sm:$0xff]
    %v901 = vld [vmem:[%s3] sm:$0x1]
    %v903 = vlaneseq
    %v904 = vshrl.u32 %v903, 7
    %v905 = vsub.s32 0, %v904
    %v906 = vrot.slane %v901, %v905
    %vm908 = vcmask 261120
    %v910 = vsel %vm908, %v852, 0
    %v913 = vsel %vm908, %v858, 0
    %v916 = vsel %vm908, %v864, 0
    %v919 = vsel %vm908, %v870, 0
    %v922 = vsel %vm908, %v876, 0
    %v925 = vsel %vm908, %v882, 0
    %v928 = vsel %vm908, %v888, 0
    %v931 = vsel %vm908, %v894, 0
    %933 = vmatprep.subr.mxu0 0.0
    %v934 = vand.u32 %v897, 4294901760
    %935 = vmatpush1.msra.mxu0 %v934
    %936 = vmatprep.subr.mxu0 0.0
    %v937 = vand.u32 %v898, 4294901760
    %938 = vmatpush1.msra.mxu0 %v937
    %939 = vmatprep.subr.mxu0 0.0
    %v940 = vand.u32 %v899, 4294901760
    %941 = vmatpush1.msra.mxu0 %v940
    %942 = vmatprep.subr.mxu0 0.0
    %v943 = vand.u32 %v900, 4294901760
    %944 = vmatpush1.msra.mxu0 %v943
    %945 = vmatprep.subr.mxu0 0.0
    %946 = vmatpush1.msra.mxu0 0.0
    %947 = vmatprep.subr.mxu0 0.0
    %948 = vmatpush1.msra.mxu0 0.0
    %949 = vmatprep.subr.mxu0 0.0
    %950 = vmatpush1.msra.mxu0 0.0
    %951 = vmatprep.subr.mxu0 0.0
    %952 = vmatpush1.msra.mxu0 0.0
    %953 = vmatprep.subr.mxu0 0.0
    %954 = vmatpush1.msra.mxu0 0.0
    %955 = vmatprep.subr.mxu0 0.0
    %956 = vmatpush1.msra.mxu0 0.0
    %957 = vmatprep.subr.mxu0 0.0
    %958 = vmatpush1.msra.mxu0 0.0
    %959 = vmatprep.subr.mxu0 0.0
    %960 = vmatpush1.msra.mxu0 0.0
    %961 = vmatprep.subr.mxu0 0.0
    %962 = vmatpush1.msra.mxu0 0.0
    %963 = vmatprep.subr.mxu0 0.0
    %964 = vmatpush1.msra.mxu0 0.0
    %965 = vmatprep.subr.mxu0 0.0
    %966 = vmatpush1.msra.mxu0 0.0
    %967 = vmatprep.subr.mxu0 0.0
    %968 = vmatpush1.msra.mxu0 0.0
    %969 = vmatprep.subr.mxu0 0.0
    %970 = vmatpush1.msra.mxu0 0.0
    %971 = vmatprep.subr.mxu0 0.0
    %972 = vmatpush1.msra.mxu0 0.0
    %973 = vmatprep.subr.mxu0 0.0
    %974 = vmatpush1.msra.mxu0 0.0
    %975 = vmatprep.subr.mxu0 0.0
    %976 = vmatpush1.msra.mxu0 0.0
    %977 = vmatprep.subr.mxu0 0.0
    %978 = vmatpush1.msra.mxu0 0.0
    %979 = vmatprep.subr.mxu0 0.0
    %980 = vmatpush1.msra.mxu0 0.0
    %981 = vmatprep.subr.mxu0 0.0
    %982 = vmatpush1.msra.mxu0 0.0
    %983 = vmatprep.subr.mxu0 0.0
    %984 = vmatpush1.msra.mxu0 0.0
    %985 = vmatprep.subr.mxu0 0.0
    %986 = vmatpush1.msra.mxu0 0.0
    %987 = vmatprep.subr.mxu0 0.0
    %988 = vmatpush1.msra.mxu0 0.0
    %989 = vmatprep.subr.mxu0 0.0
    %990 = vmatpush1.msra.mxu0 0.0
    %991 = vmatprep.subr.mxu0 0.0
    %992 = vmatpush1.msra.mxu0 0.0
    %993 = vmatprep.subr.mxu0 0.0
    %994 = vmatpush1.msra.mxu0 0.0
    %995 = vmatprep.subr.mxu0 0.0
    %996 = vmatpush1.msra.mxu0 0.0
    %997 = vmatprep.subr.mxu0 0.0
    %998 = vmatpush1.msra.mxu0 0.0
    %999 = vmatprep.subr.mxu0 0.0
    %1000 = vmatpush1.msra.mxu0 0.0
    %1001 = vmatprep.mubr.f32.mxu0 0.0
    %v1002 = vand.u32 %v910, 4294901760
    %v1003 = vsub.f32 %v910, %v1002
    %v1004 = vand.u32 %v1003, 4294901760
    %v1005 = vsub.f32 %v1003, %v1004
    %v1006 = vand.u32 %v1005, 4294901760
    %1007 = vmatmul.mubr.f32.gmra.mrb[0].mxu0 %v1006
    %v1008 = vpop.f32.mrb[0].mxu0
    %v1009 = vadd.f32 %v906, %v1008
    %v1010 = vpop.f32.mrb[0].mxu0
    %1011 = vmatprep.mubr.f32.mxu0 0.0
    %v1012 = vand.u32 %v913, 4294901760
    %v1013 = vsub.f32 %v913, %v1012
    %v1014 = vand.u32 %v1013, 4294901760
    %v1015 = vsub.f32 %v1013, %v1014
    %v1016 = vand.u32 %v1015, 4294901760
    %1017 = vmatmul.mubr.f32.gmra.mrb[0].mxu0 %v1016
    %v1018 = vpop.f32.mrb[0].mxu0
    %v1019 = vadd.f32 %v906, %v1018
    %v1020 = vpop.f32.mrb[0].mxu0
    %1021 = vmatprep.mubr.f32.mxu0 0.0
    %v1022 = vand.u32 %v916, 4294901760
    %v1023 = vsub.f32 %v916, %v1022
    %v1024 = vand.u32 %v1023, 4294901760
    %v1025 = vsub.f32 %v1023, %v1024
    %v1026 = vand.u32 %v1025, 4294901760
    %1027 = vmatmul.mubr.f32.gmra.mrb[0].mxu0 %v1026
    %v1028 = vpop.f32.mrb[0].mxu0
    %v1029 = vadd.f32 %v906, %v1028
    %v1030 = vpop.f32.mrb[0].mxu0
    %1031 = vmatprep.mubr.f32.mxu0 0.0
    %v1032 = vand.u32 %v919, 4294901760
    %v1033 = vsub.f32 %v919, %v1032
    %v1034 = vand.u32 %v1033, 4294901760
    %v1035 = vsub.f32 %v1033, %v1034
    %v1036 = vand.u32 %v1035, 4294901760
    %1037 = vmatmul.mubr.f32.gmra.mrb[0].mxu0 %v1036
    %v1038 = vpop.f32.mrb[0].mxu0
    %v1039 = vadd.f32 %v906, %v1038
    %v1040 = vpop.f32.mrb[0].mxu0
    %1041 = vmatprep.mubr.f32.mxu0 0.0
    %v1042 = vand.u32 %v922, 4294901760
    %v1043 = vsub.f32 %v922, %v1042
    %v1044 = vand.u32 %v1043, 4294901760
    %v1045 = vsub.f32 %v1043, %v1044
    %v1046 = vand.u32 %v1045, 4294901760
    %1047 = vmatmul.mubr.f32.gmra.mrb[0].mxu0 %v1046
    %v1048 = vpop.f32.mrb[0].mxu0
    %v1049 = vadd.f32 %v906, %v1048
    %v1050 = vpop.f32.mrb[0].mxu0
    %1051 = vmatprep.mubr.f32.mxu0 0.0
    %v1052 = vand.u32 %v925, 4294901760
    %v1053 = vsub.f32 %v925, %v1052
    %v1054 = vand.u32 %v1053, 4294901760
    %v1055 = vsub.f32 %v1053, %v1054
    %v1056 = vand.u32 %v1055, 4294901760
    %1057 = vmatmul.mubr.f32.gmra.mrb[0].mxu0 %v1056
    %v1058 = vpop.f32.mrb[0].mxu0
    %v1059 = vadd.f32 %v906, %v1058
    %v1060 = vpop.f32.mrb[0].mxu0
    %1061 = vmatprep.mubr.f32.mxu0 0.0
    %v1062 = vand.u32 %v928, 4294901760
    %v1063 = vsub.f32 %v928, %v1062
    %v1064 = vand.u32 %v1063, 4294901760
    %v1065 = vsub.f32 %v1063, %v1064
    %v1066 = vand.u32 %v1065, 4294901760
    %1067 = vmatmul.mubr.f32.gmra.mrb[0].mxu0 %v1066
    %v1068 = vpop.f32.mrb[0].mxu0
    %v1069 = vadd.f32 %v906, %v1068
    %v1070 = vpop.f32.mrb[0].mxu0
    %1071 = vmatprep.mubr.f32.mxu0 0.0
    %v1072 = vand.u32 %v931, 4294901760
    %v1073 = vsub.f32 %v931, %v1072
    %v1074 = vand.u32 %v1073, 4294901760
    %v1075 = vsub.f32 %v1073, %v1074
    %v1076 = vand.u32 %v1075, 4294901760
    %1077 = vmatmul.mubr.f32.gmra.mrb[0].mxu0 %v1076
    %v1078 = vpop.f32.mrb[0].mxu0
    %v1079 = vadd.f32 %v906, %v1078
    %v1080 = vpop.f32.mrb[0].mxu0
    %1081 = vdwg.mxu0
    %1082 = vmatprep.subr.mxu0 0.0
    %v1083 = vand.u32 %v897, 4294901760
    %v1084 = vsub.f32 %v897, %v1083
    %v1085 = vand.u32 %v1084, 4294901760
    %v1086 = vsub.f32 %v1084, %v1085
    %v1087 = vand.u32 %v1086, 4294901760
    %1088 = vmatpush1.msra.mxu0 %v1087
    %1089 = vmatprep.subr.mxu0 0.0
    %v1090 = vand.u32 %v898, 4294901760
    %v1091 = vsub.f32 %v898, %v1090
    %v1092 = vand.u32 %v1091, 4294901760
    %v1093 = vsub.f32 %v1091, %v1092
    %v1094 = vand.u32 %v1093, 4294901760
    %1095 = vmatpush1.msra.mxu0 %v1094
    %1096 = vmatprep.subr.mxu0 0.0
    %v1097 = vand.u32 %v899, 4294901760
    %v1098 = vsub.f32 %v899, %v1097
    %v1099 = vand.u32 %v1098, 4294901760
    %v1100 = vsub.f32 %v1098, %v1099
    %v1101 = vand.u32 %v1100, 4294901760
    %1102 = vmatpush1.msra.mxu0 %v1101
    %1103 = vmatprep.subr.mxu0 0.0
    %v1104 = vand.u32 %v900, 4294901760
    %v1105 = vsub.f32 %v900, %v1104
    %v1106 = vand.u32 %v1105, 4294901760
    %v1107 = vsub.f32 %v1105, %v1106
    %v1108 = vand.u32 %v1107, 4294901760
    %1109 = vmatpush1.msra.mxu0 %v1108
    %1110 = vmatprep.subr.mxu0 0.0
    %1111 = vmatpush1.msra.mxu0 0.0
    %1112 = vmatprep.subr.mxu0 0.0
    %1113 = vmatpush1.msra.mxu0 0.0
    %1114 = vmatprep.subr.mxu0 0.0
    %1115 = vmatpush1.msra.mxu0 0.0
    %1116 = vmatprep.subr.mxu0 0.0
    %1117 = vmatpush1.msra.mxu0 0.0
    %1118 = vmatprep.subr.mxu0 0.0
    %1119 = vmatpush1.msra.mxu0 0.0
    %1120 = vmatprep.subr.mxu0 0.0
    %1121 = vmatpush1.msra.mxu0 0.0
    %1122 = vmatprep.subr.mxu0 0.0
    %1123 = vmatpush1.msra.mxu0 0.0
    %1124 = vmatprep.subr.mxu0 0.0
    %1125 = vmatpush1.msra.mxu0 0.0
    %1126 = vmatprep.subr.mxu0 0.0
    %1127 = vmatpush1.msra.mxu0 0.0
    %1128 = vmatprep.subr.mxu0 0.0
    %1129 = vmatpush1.msra.mxu0 0.0
    %1130 = vmatprep.subr.mxu0 0.0
    %1131 = vmatpush1.msra.mxu0 0.0
    %1132 = vmatprep.subr.mxu0 0.0
    %1133 = vmatpush1.msra.mxu0 0.0
    %1134 = vmatprep.subr.mxu0 0.0
    %1135 = vmatpush1.msra.mxu0 0.0
    %1136 = vmatprep.subr.mxu0 0.0
    %1137 = vmatpush1.msra.mxu0 0.0
    %1138 = vmatprep.subr.mxu0 0.0
    %1139 = vmatpush1.msra.mxu0 0.0
    %1140 = vmatprep.subr.mxu0 0.0
    %1141 = vmatpush1.msra.mxu0 0.0
    %1142 = vmatprep.subr.mxu0 0.0
    %1143 = vmatpush1.msra.mxu0 0.0
    %1144 = vmatprep.subr.mxu0 0.0
    %1145 = vmatpush1.msra.mxu0 0.0
    %1146 = vmatprep.subr.mxu0 0.0
    %1147 = vmatpush1.msra.mxu0 0.0
    %1148 = vmatprep.subr.mxu0 0.0
    %1149 = vmatpush1.msra.mxu0 0.0
    %1150 = vmatprep.subr.mxu0 0.0
    %1151 = vmatpush1.msra.mxu0 0.0
    %1152 = vmatprep.subr.mxu0 0.0
    %1153 = vmatpush1.msra.mxu0 0.0
    %1154 = vmatprep.subr.mxu0 0.0
    %1155 = vmatpush1.msra.mxu0 0.0
    %1156 = vmatprep.subr.mxu0 0.0
    %1157 = vmatpush1.msra.mxu0 0.0
    %1158 = vmatprep.subr.mxu0 0.0
    %1159 = vmatpush1.msra.mxu0 0.0
    %1160 = vmatprep.subr.mxu0 0.0
    %1161 = vmatpush1.msra.mxu0 0.0
    %1162 = vmatprep.subr.mxu0 0.0
    %1163 = vmatpush1.msra.mxu0 0.0
    %1164 = vmatprep.subr.mxu0 0.0
    %1165 = vmatpush1.msra.mxu0 0.0
    %1166 = vmatprep.mubr.f32.mxu0 0.0
    %v1167 = vand.u32 %v910, 4294901760
    %1168 = vmatmul.mubr.f32.gmra.mrb[0].mxu0 %v1167
    %v1169 = vpop.f32.mrb[0].mxu0
    %v1170 = vadd.f32 %v1009, %v1169
    %v1171 = vpop.f32.mrb[0].mxu0
    %1172 = vmatprep.mubr.f32.mxu0 0.0
    %v1173 = vand.u32 %v913, 4294901760
    %1174 = vmatmul.mubr.f32.gmra.mrb[0].mxu0 %v1173
    %v1175 = vpop.f32.mrb[0].mxu0
    %v1176 = vadd.f32 %v1019, %v1175
    %v1177 = vpop.f32.mrb[0].mxu0
    %1178 = vmatprep.mubr.f32.mxu0 0.0
    %v1179 = vand.u32 %v916, 4294901760
    %1180 = vmatmul.mubr.f32.gmra.mrb[0].mxu0 %v1179
    %v1181 = vpop.f32.mrb[0].mxu0
    %v1182 = vadd.f32 %v1029, %v1181
    %v1183 = vpop.f32.mrb[0].mxu0
    %1184 = vmatprep.mubr.f32.mxu0 0.0
    %v1185 = vand.u32 %v919, 4294901760
    %1186 = vmatmul.mubr.f32.gmra.mrb[0].mxu0 %v1185
    %v1187 = vpop.f32.mrb[0].mxu0
    %v1188 = vadd.f32 %v1039, %v1187
    %v1189 = vpop.f32.mrb[0].mxu0
    %1190 = vmatprep.mubr.f32.mxu0 0.0
    %v1191 = vand.u32 %v922, 4294901760
    %1192 = vmatmul.mubr.f32.gmra.mrb[0].mxu0 %v1191
    %v1193 = vpop.f32.mrb[0].mxu0
    %v1194 = vadd.f32 %v1049, %v1193
    %v1195 = vpop.f32.mrb[0].mxu0
    %1196 = vmatprep.mubr.f32.mxu0 0.0
    %v1197 = vand.u32 %v925, 4294901760
    %1198 = vmatmul.mubr.f32.gmra.mrb[0].mxu0 %v1197
    %v1199 = vpop.f32.mrb[0].mxu0
    %v1200 = vadd.f32 %v1059, %v1199
    %v1201 = vpop.f32.mrb[0].mxu0
    %1202 = vmatprep.mubr.f32.mxu0 0.0
    %v1203 = vand.u32 %v928, 4294901760
    %1204 = vmatmul.mubr.f32.gmra.mrb[0].mxu0 %v1203
    %v1205 = vpop.f32.mrb[0].mxu0
    %v1206 = vadd.f32 %v1069, %v1205
    %v1207 = vpop.f32.mrb[0].mxu0
    %1208 = vmatprep.mubr.f32.mxu0 0.0
    %v1209 = vand.u32 %v931, 4294901760
    %1210 = vmatmul.mubr.f32.gmra.mrb[0].mxu0 %v1209
    %v1211 = vpop.f32.mrb[0].mxu0
    %v1212 = vadd.f32 %v1079, %v1211
    %v1213 = vpop.f32.mrb[0].mxu0
    %1214 = vdwg.mxu0
    %1215 = vmatprep.subr.mxu0 0.0
    %v1216 = vand.u32 %v897, 4294901760
    %v1217 = vsub.f32 %v897, %v1216
    %1218 = vmatpush1.msra.mxu0 %v1217
    %1219 = vmatprep.subr.mxu0 0.0
    %v1220 = vand.u32 %v898, 4294901760
    %v1221 = vsub.f32 %v898, %v1220
    %1222 = vmatpush1.msra.mxu0 %v1221
    %1223 = vmatprep.subr.mxu0 0.0
    %v1224 = vand.u32 %v899, 4294901760
    %v1225 = vsub.f32 %v899, %v1224
    %1226 = vmatpush1.msra.mxu0 %v1225
    %1227 = vmatprep.subr.mxu0 0.0
    %v1228 = vand.u32 %v900, 4294901760
    %v1229 = vsub.f32 %v900, %v1228
    %1230 = vmatpush1.msra.mxu0 %v1229
    %1231 = vmatprep.subr.mxu0 0.0
    %1232 = vmatpush1.msra.mxu0 0.0
    %1233 = vmatprep.subr.mxu0 0.0
    %1234 = vmatpush1.msra.mxu0 0.0
    %1235 = vmatprep.subr.mxu0 0.0
    %1236 = vmatpush1.msra.mxu0 0.0
    %1237 = vmatprep.subr.mxu0 0.0
    %1238 = vmatpush1.msra.mxu0 0.0
    %1239 = vmatprep.subr.mxu0 0.0
    %1240 = vmatpush1.msra.mxu0 0.0
    %1241 = vmatprep.subr.mxu0 0.0
    %1242 = vmatpush1.msra.mxu0 0.0
    %1243 = vmatprep.subr.mxu0 0.0
    %1244 = vmatpush1.msra.mxu0 0.0
    %1245 = vmatprep.subr.mxu0 0.0
    %1246 = vmatpush1.msra.mxu0 0.0
    %1247 = vmatprep.subr.mxu0 0.0
    %1248 = vmatpush1.msra.mxu0 0.0
    %1249 = vmatprep.subr.mxu0 0.0
    %1250 = vmatpush1.msra.mxu0 0.0
    %1251 = vmatprep.subr.mxu0 0.0
    %1252 = vmatpush1.msra.mxu0 0.0
    %1253 = vmatprep.subr.mxu0 0.0
    %1254 = vmatpush1.msra.mxu0 0.0
    %1255 = vmatprep.subr.mxu0 0.0
    %1256 = vmatpush1.msra.mxu0 0.0
    %1257 = vmatprep.subr.mxu0 0.0
    %1258 = vmatpush1.msra.mxu0 0.0
    %1259 = vmatprep.subr.mxu0 0.0
    %1260 = vmatpush1.msra.mxu0 0.0
    %1261 = vmatprep.subr.mxu0 0.0
    %1262 = vmatpush1.msra.mxu0 0.0
    %1263 = vmatprep.subr.mxu0 0.0
    %1264 = vmatpush1.msra.mxu0 0.0
    %1265 = vmatprep.subr.mxu0 0.0
    %1266 = vmatpush1.msra.mxu0 0.0
    %1267 = vmatprep.subr.mxu0 0.0
    %1268 = vmatpush1.msra.mxu0 0.0
    %1269 = vmatprep.subr.mxu0 0.0
    %1270 = vmatpush1.msra.mxu0 0.0
    %1271 = vmatprep.subr.mxu0 0.0
    %1272 = vmatpush1.msra.mxu0 0.0
    %1273 = vmatprep.subr.mxu0 0.0
    %1274 = vmatpush1.msra.mxu0 0.0
    %1275 = vmatprep.subr.mxu0 0.0
    %1276 = vmatpush1.msra.mxu0 0.0
    %1277 = vmatprep.subr.mxu0 0.0
    %1278 = vmatpush1.msra.mxu0 0.0
    %1279 = vmatprep.subr.mxu0 0.0
    %1280 = vmatpush1.msra.mxu0 0.0
    %1281 = vmatprep.subr.mxu0 0.0
    %1282 = vmatpush1.msra.mxu0 0.0
    %1283 = vmatprep.subr.mxu0 0.0
    %1284 = vmatpush1.msra.mxu0 0.0
    %1285 = vmatprep.subr.mxu0 0.0
    %1286 = vmatpush1.msra.mxu0 0.0
    %1287 = vmatprep.mubr.f32.mxu0 0.0
    %v1288 = vand.u32 %v910, 4294901760
    %v1289 = vsub.f32 %v910, %v1288
    %1290 = vmatmul.mubr.f32.gmra.mrb[0].mxu0 %v1289
    %v1291 = vpop.f32.mrb[0].mxu0
    %v1292 = vadd.f32 %v1170, %v1291
    %v1293 = vpop.f32.mrb[0].mxu0
    %1294 = vmatprep.mubr.f32.mxu0 0.0
    %v1295 = vand.u32 %v913, 4294901760
    %v1296 = vsub.f32 %v913, %v1295
    %1297 = vmatmul.mubr.f32.gmra.mrb[0].mxu0 %v1296
    %v1298 = vpop.f32.mrb[0].mxu0
    %v1299 = vadd.f32 %v1176, %v1298
    %v1300 = vpop.f32.mrb[0].mxu0
    %1301 = vmatprep.mubr.f32.mxu0 0.0
    %v1302 = vand.u32 %v916, 4294901760
    %v1303 = vsub.f32 %v916, %v1302
    %1304 = vmatmul.mubr.f32.gmra.mrb[0].mxu0 %v1303
    %v1305 = vpop.f32.mrb[0].mxu0
    %v1306 = vadd.f32 %v1182, %v1305
    %v1307 = vpop.f32.mrb[0].mxu0
    %1308 = vmatprep.mubr.f32.mxu0 0.0
    %v1309 = vand.u32 %v919, 4294901760
    %v1310 = vsub.f32 %v919, %v1309
    %1311 = vmatmul.mubr.f32.gmra.mrb[0].mxu0 %v1310
    %v1312 = vpop.f32.mrb[0].mxu0
    %v1313 = vadd.f32 %v1188, %v1312
    %v1314 = vpop.f32.mrb[0].mxu0
    %1315 = vmatprep.mubr.f32.mxu0 0.0
    %v1316 = vand.u32 %v922, 4294901760
    %v1317 = vsub.f32 %v922, %v1316
    %1318 = vmatmul.mubr.f32.gmra.mrb[0].mxu0 %v1317
    %v1319 = vpop.f32.mrb[0].mxu0
    %v1320 = vadd.f32 %v1194, %v1319
    %v1321 = vpop.f32.mrb[0].mxu0
    %1322 = vmatprep.mubr.f32.mxu0 0.0
    %v1323 = vand.u32 %v925, 4294901760
    %v1324 = vsub.f32 %v925, %v1323
    %1325 = vmatmul.mubr.f32.gmra.mrb[0].mxu0 %v1324
    %v1326 = vpop.f32.mrb[0].mxu0
    %v1327 = vadd.f32 %v1200, %v1326
    %v1328 = vpop.f32.mrb[0].mxu0
    %1329 = vmatprep.mubr.f32.mxu0 0.0
    %v1330 = vand.u32 %v928, 4294901760
    %v1331 = vsub.f32 %v928, %v1330
    %1332 = vmatmul.mubr.f32.gmra.mrb[0].mxu0 %v1331
    %v1333 = vpop.f32.mrb[0].mxu0
    %v1334 = vadd.f32 %v1206, %v1333
    %v1335 = vpop.f32.mrb[0].mxu0
    %1336 = vmatprep.mubr.f32.mxu0 0.0
    %v1337 = vand.u32 %v931, 4294901760
    %v1338 = vsub.f32 %v931, %v1337
    %1339 = vmatmul.mubr.f32.gmra.mrb[0].mxu0 %v1338
    %v1340 = vpop.f32.mrb[0].mxu0
    %v1341 = vadd.f32 %v1212, %v1340
    %v1342 = vpop.f32.mrb[0].mxu0
    %1343 = vdwg.mxu0
    %1344 = vmatprep.subr.mxu0 0.0
    %v1345 = vand.u32 %v897, 4294901760
    %1346 = vmatpush1.msra.mxu0 %v1345
    %1347 = vmatprep.subr.mxu0 0.0
    %v1348 = vand.u32 %v898, 4294901760
    %1349 = vmatpush1.msra.mxu0 %v1348
    %1350 = vmatprep.subr.mxu0 0.0
    %v1351 = vand.u32 %v899, 4294901760
    %1352 = vmatpush1.msra.mxu0 %v1351
    %1353 = vmatprep.subr.mxu0 0.0
    %v1354 = vand.u32 %v900, 4294901760
    %1355 = vmatpush1.msra.mxu0 %v1354
    %1356 = vmatprep.subr.mxu0 0.0
    %1357 = vmatpush1.msra.mxu0 0.0
    %1358 = vmatprep.subr.mxu0 0.0
    %1359 = vmatpush1.msra.mxu0 0.0
    %1360 = vmatprep.subr.mxu0 0.0
    %1361 = vmatpush1.msra.mxu0 0.0
    %1362 = vmatprep.subr.mxu0 0.0
    %1363 = vmatpush1.msra.mxu0 0.0
    %1364 = vmatprep.subr.mxu0 0.0
    %1365 = vmatpush1.msra.mxu0 0.0
    %1366 = vmatprep.subr.mxu0 0.0
    %1367 = vmatpush1.msra.mxu0 0.0
    %1368 = vmatprep.subr.mxu0 0.0
    %1369 = vmatpush1.msra.mxu0 0.0
    %1370 = vmatprep.subr.mxu0 0.0
    %1371 = vmatpush1.msra.mxu0 0.0
    %1372 = vmatprep.subr.mxu0 0.0
    %1373 = vmatpush1.msra.mxu0 0.0
    %1374 = vmatprep.subr.mxu0 0.0
    %1375 = vmatpush1.msra.mxu0 0.0
    %1376 = vmatprep.subr.mxu0 0.0
    %1377 = vmatpush1.msra.mxu0 0.0
    %1378 = vmatprep.subr.mxu0 0.0
    %1379 = vmatpush1.msra.mxu0 0.0
    %1380 = vmatprep.subr.mxu0 0.0
    %1381 = vmatpush1.msra.mxu0 0.0
    %1382 = vmatprep.subr.mxu0 0.0
    %1383 = vmatpush1.msra.mxu0 0.0
    %1384 = vmatprep.subr.mxu0 0.0
    %1385 = vmatpush1.msra.mxu0 0.0
    %1386 = vmatprep.subr.mxu0 0.0
    %1387 = vmatpush1.msra.mxu0 0.0
    %1388 = vmatprep.subr.mxu0 0.0
    %1389 = vmatpush1.msra.mxu0 0.0
    %1390 = vmatprep.subr.mxu0 0.0
    %1391 = vmatpush1.msra.mxu0 0.0
    %1392 = vmatprep.subr.mxu0 0.0
    %1393 = vmatpush1.msra.mxu0 0.0
    %1394 = vmatprep.subr.mxu0 0.0
    %1395 = vmatpush1.msra.mxu0 0.0
    %1396 = vmatprep.subr.mxu0 0.0
    %1397 = vmatpush1.msra.mxu0 0.0
    %1398 = vmatprep.subr.mxu0 0.0
    %1399 = vmatpush1.msra.mxu0 0.0
    %1400 = vmatprep.subr.mxu0 0.0
    %1401 = vmatpush1.msra.mxu0 0.0
    %1402 = vmatprep.subr.mxu0 0.0
    %1403 = vmatpush1.msra.mxu0 0.0
    %1404 = vmatprep.subr.mxu0 0.0
    %1405 = vmatpush1.msra.mxu0 0.0
    %1406 = vmatprep.subr.mxu0 0.0
    %1407 = vmatpush1.msra.mxu0 0.0
    %1408 = vmatprep.subr.mxu0 0.0
    %1409 = vmatpush1.msra.mxu0 0.0
    %1410 = vmatprep.subr.mxu0 0.0
    %1411 = vmatpush1.msra.mxu0 0.0
    %1412 = vmatprep.mubr.f32.mxu0 0.0
    %v1413 = vand.u32 %v910, 4294901760
    %v1414 = vsub.f32 %v910, %v1413
    %v1415 = vand.u32 %v1414, 4294901760
    %1416 = vmatmul.mubr.f32.gmra.mrb[0].mxu0 %v1415
    %v1417 = vpop.f32.mrb[0].mxu0
    %v1418 = vadd.f32 %v1292, %v1417
    %v1419 = vpop.f32.mrb[0].mxu0
    %1420 = vmatprep.mubr.f32.mxu0 0.0
    %v1421 = vand.u32 %v913, 4294901760
    %v1422 = vsub.f32 %v913, %v1421
    %v1423 = vand.u32 %v1422, 4294901760
    %1424 = vmatmul.mubr.f32.gmra.mrb[0].mxu0 %v1423
    %v1425 = vpop.f32.mrb[0].mxu0
    %v1426 = vadd.f32 %v1299, %v1425
    %v1427 = vpop.f32.mrb[0].mxu0
    %1428 = vmatprep.mubr.f32.mxu0 0.0
    %v1429 = vand.u32 %v916, 4294901760
    %v1430 = vsub.f32 %v916, %v1429
    %v1431 = vand.u32 %v1430, 4294901760
    %1432 = vmatmul.mubr.f32.gmra.mrb[0].mxu0 %v1431
    %v1433 = vpop.f32.mrb[0].mxu0
    %v1434 = vadd.f32 %v1306, %v1433
    %v1435 = vpop.f32.mrb[0].mxu0
    %1436 = vmatprep.mubr.f32.mxu0 0.0
    %v1437 = vand.u32 %v919, 4294901760
    %v1438 = vsub.f32 %v919, %v1437
    %v1439 = vand.u32 %v1438, 4294901760
    %1440 = vmatmul.mubr.f32.gmra.mrb[0].mxu0 %v1439
    %v1441 = vpop.f32.mrb[0].mxu0
    %v1442 = vadd.f32 %v1313, %v1441
    %v1443 = vpop.f32.mrb[0].mxu0
    %1444 = vmatprep.mubr.f32.mxu0 0.0
    %v1445 = vand.u32 %v922, 4294901760
    %v1446 = vsub.f32 %v922, %v1445
    %v1447 = vand.u32 %v1446, 4294901760
    %1448 = vmatmul.mubr.f32.gmra.mrb[0].mxu0 %v1447
    %v1449 = vpop.f32.mrb[0].mxu0
    %v1450 = vadd.f32 %v1320, %v1449
    %v1451 = vpop.f32.mrb[0].mxu0
    %1452 = vmatprep.mubr.f32.mxu0 0.0
    %v1453 = vand.u32 %v925, 4294901760
    %v1454 = vsub.f32 %v925, %v1453
    %v1455 = vand.u32 %v1454, 4294901760
    %1456 = vmatmul.mubr.f32.gmra.mrb[0].mxu0 %v1455
    %v1457 = vpop.f32.mrb[0].mxu0
    %v1458 = vadd.f32 %v1327, %v1457
    %v1459 = vpop.f32.mrb[0].mxu0
    %1460 = vmatprep.mubr.f32.mxu0 0.0
    %v1461 = vand.u32 %v928, 4294901760
    %v1462 = vsub.f32 %v928, %v1461
    %v1463 = vand.u32 %v1462, 4294901760
    %1464 = vmatmul.mubr.f32.gmra.mrb[0].mxu0 %v1463
    %v1465 = vpop.f32.mrb[0].mxu0
    %v1466 = vadd.f32 %v1334, %v1465
    %v1467 = vpop.f32.mrb[0].mxu0
    %1468 = vmatprep.mubr.f32.mxu0 0.0
    %v1469 = vand.u32 %v931, 4294901760
    %v1470 = vsub.f32 %v931, %v1469
    %v1471 = vand.u32 %v1470, 4294901760
    %1472 = vmatmul.mubr.f32.gmra.mrb[0].mxu0 %v1471
    %v1473 = vpop.f32.mrb[0].mxu0
    %v1474 = vadd.f32 %v1341, %v1473
    %v1475 = vpop.f32.mrb[0].mxu0
    %1476 = vdwg.mxu0
    %1477 = vmatprep.subr.mxu0 0.0
    %v1478 = vand.u32 %v897, 4294901760
    %v1479 = vsub.f32 %v897, %v1478
    %v1480 = vand.u32 %v1479, 4294901760
    %1481 = vmatpush1.msra.mxu0 %v1480
    %1482 = vmatprep.subr.mxu0 0.0
    %v1483 = vand.u32 %v898, 4294901760
    %v1484 = vsub.f32 %v898, %v1483
    %v1485 = vand.u32 %v1484, 4294901760
    %1486 = vmatpush1.msra.mxu0 %v1485
    %1487 = vmatprep.subr.mxu0 0.0
    %v1488 = vand.u32 %v899, 4294901760
    %v1489 = vsub.f32 %v899, %v1488
    %v1490 = vand.u32 %v1489, 4294901760
    %1491 = vmatpush1.msra.mxu0 %v1490
    %1492 = vmatprep.subr.mxu0 0.0
    %v1493 = vand.u32 %v900, 4294901760
    %v1494 = vsub.f32 %v900, %v1493
    %v1495 = vand.u32 %v1494, 4294901760
    %1496 = vmatpush1.msra.mxu0 %v1495
    %1497 = vmatprep.subr.mxu0 0.0
    %1498 = vmatpush1.msra.mxu0 0.0
    %1499 = vmatprep.subr.mxu0 0.0
    %1500 = vmatpush1.msra.mxu0 0.0
    %1501 = vmatprep.subr.mxu0 0.0
    %1502 = vmatpush1.msra.mxu0 0.0
    %1503 = vmatprep.subr.mxu0 0.0
    %1504 = vmatpush1.msra.mxu0 0.0
    %1505 = vmatprep.subr.mxu0 0.0
    %1506 = vmatpush1.msra.mxu0 0.0
    %1507 = vmatprep.subr.mxu0 0.0
    %1508 = vmatpush1.msra.mxu0 0.0
    %1509 = vmatprep.subr.mxu0 0.0
    %1510 = vmatpush1.msra.mxu0 0.0
    %1511 = vmatprep.subr.mxu0 0.0
    %1512 = vmatpush1.msra.mxu0 0.0
    %1513 = vmatprep.subr.mxu0 0.0
    %1514 = vmatpush1.msra.mxu0 0.0
    %1515 = vmatprep.subr.mxu0 0.0
    %1516 = vmatpush1.msra.mxu0 0.0
    %1517 = vmatprep.subr.mxu0 0.0
    %1518 = vmatpush1.msra.mxu0 0.0
    %1519 = vmatprep.subr.mxu0 0.0
    %1520 = vmatpush1.msra.mxu0 0.0
    %1521 = vmatprep.subr.mxu0 0.0
    %1522 = vmatpush1.msra.mxu0 0.0
    %1523 = vmatprep.subr.mxu0 0.0
    %1524 = vmatpush1.msra.mxu0 0.0
    %1525 = vmatprep.subr.mxu0 0.0
    %1526 = vmatpush1.msra.mxu0 0.0
    %1527 = vmatprep.subr.mxu0 0.0
    %1528 = vmatpush1.msra.mxu0 0.0
    %1529 = vmatprep.subr.mxu0 0.0
    %1530 = vmatpush1.msra.mxu0 0.0
    %1531 = vmatprep.subr.mxu0 0.0
    %1532 = vmatpush1.msra.mxu0 0.0
    %1533 = vmatprep.subr.mxu0 0.0
    %1534 = vmatpush1.msra.mxu0 0.0
    %1535 = vmatprep.subr.mxu0 0.0
    %1536 = vmatpush1.msra.mxu0 0.0
    %1537 = vmatprep.subr.mxu0 0.0
    %1538 = vmatpush1.msra.mxu0 0.0
    %1539 = vmatprep.subr.mxu0 0.0
    %1540 = vmatpush1.msra.mxu0 0.0
    %1541 = vmatprep.subr.mxu0 0.0
    %1542 = vmatpush1.msra.mxu0 0.0
    %1543 = vmatprep.subr.mxu0 0.0
    %1544 = vmatpush1.msra.mxu0 0.0
    %1545 = vmatprep.subr.mxu0 0.0
    %1546 = vmatpush1.msra.mxu0 0.0
    %1547 = vmatprep.subr.mxu0 0.0
    %1548 = vmatpush1.msra.mxu0 0.0
    %1549 = vmatprep.subr.mxu0 0.0
    %1550 = vmatpush1.msra.mxu0 0.0
    %1551 = vmatprep.subr.mxu0 0.0
    %1552 = vmatpush1.msra.mxu0 0.0
    %1553 = vmatprep.mubr.f32.mxu0 0.0
    %v1554 = vand.u32 %v910, 4294901760
    %1555 = vmatmul.mubr.f32.gmra.mrb[0].mxu0 %v1554
    %v1556 = vpop.f32.mrb[0].mxu0
    %v1557 = vadd.f32 %v1418, %v1556
    %v1558 = vpop.f32.mrb[0].mxu0
    %1559 = vmatprep.mubr.f32.mxu0 0.0
    %v1560 = vand.u32 %v913, 4294901760
    %1561 = vmatmul.mubr.f32.gmra.mrb[0].mxu0 %v1560
    %v1562 = vpop.f32.mrb[0].mxu0
    %v1563 = vadd.f32 %v1426, %v1562
    %v1564 = vpop.f32.mrb[0].mxu0
    %1565 = vmatprep.mubr.f32.mxu0 0.0
    %v1566 = vand.u32 %v916, 4294901760
    %1567 = vmatmul.mubr.f32.gmra.mrb[0].mxu0 %v1566
    %v1568 = vpop.f32.mrb[0].mxu0
    %v1569 = vadd.f32 %v1434, %v1568
    %v1570 = vpop.f32.mrb[0].mxu0
    %1571 = vmatprep.mubr.f32.mxu0 0.0
    %v1572 = vand.u32 %v919, 4294901760
    %1573 = vmatmul.mubr.f32.gmra.mrb[0].mxu0 %v1572
    %v1574 = vpop.f32.mrb[0].mxu0
    %v1575 = vadd.f32 %v1442, %v1574
    %v1576 = vpop.f32.mrb[0].mxu0
    %1577 = vmatprep.mubr.f32.mxu0 0.0
    %v1578 = vand.u32 %v922, 4294901760
    %1579 = vmatmul.mubr.f32.gmra.mrb[0].mxu0 %v1578
    %v1580 = vpop.f32.mrb[0].mxu0
    %v1581 = vadd.f32 %v1450, %v1580
    %v1582 = vpop.f32.mrb[0].mxu0
    %1583 = vmatprep.mubr.f32.mxu0 0.0
    %v1584 = vand.u32 %v925, 4294901760
    %1585 = vmatmul.mubr.f32.gmra.mrb[0].mxu0 %v1584
    %v1586 = vpop.f32.mrb[0].mxu0
    %v1587 = vadd.f32 %v1458, %v1586
    %v1588 = vpop.f32.mrb[0].mxu0
    %1589 = vmatprep.mubr.f32.mxu0 0.0
    %v1590 = vand.u32 %v928, 4294901760
    %1591 = vmatmul.mubr.f32.gmra.mrb[0].mxu0 %v1590
    %v1592 = vpop.f32.mrb[0].mxu0
    %v1593 = vadd.f32 %v1466, %v1592
    %v1594 = vpop.f32.mrb[0].mxu0
    %1595 = vmatprep.mubr.f32.mxu0 0.0
    %v1596 = vand.u32 %v931, 4294901760
    %1597 = vmatmul.mubr.f32.gmra.mrb[0].mxu0 %v1596
    %v1598 = vpop.f32.mrb[0].mxu0
    %v1599 = vadd.f32 %v1474, %v1598
    %v1600 = vpop.f32.mrb[0].mxu0
    %1601 = vdwg.mxu0
    %1602 = vmatprep.subr.mxu0 0.0
    %v1603 = vand.u32 %v897, 4294901760
    %1604 = vmatpush1.msra.mxu0 %v1603
    %1605 = vmatprep.subr.mxu0 0.0
    %v1606 = vand.u32 %v898, 4294901760
    %1607 = vmatpush1.msra.mxu0 %v1606
    %1608 = vmatprep.subr.mxu0 0.0
    %v1609 = vand.u32 %v899, 4294901760
    %1610 = vmatpush1.msra.mxu0 %v1609
    %1611 = vmatprep.subr.mxu0 0.0
    %v1612 = vand.u32 %v900, 4294901760
    %1613 = vmatpush1.msra.mxu0 %v1612
    %1614 = vmatprep.subr.mxu0 0.0
    %1615 = vmatpush1.msra.mxu0 0.0
    %1616 = vmatprep.subr.mxu0 0.0
    %1617 = vmatpush1.msra.mxu0 0.0
    %1618 = vmatprep.subr.mxu0 0.0
    %1619 = vmatpush1.msra.mxu0 0.0
    %1620 = vmatprep.subr.mxu0 0.0
    %1621 = vmatpush1.msra.mxu0 0.0
    %1622 = vmatprep.subr.mxu0 0.0
    %1623 = vmatpush1.msra.mxu0 0.0
    %1624 = vmatprep.subr.mxu0 0.0
    %1625 = vmatpush1.msra.mxu0 0.0
    %1626 = vmatprep.subr.mxu0 0.0
    %1627 = vmatpush1.msra.mxu0 0.0
    %1628 = vmatprep.subr.mxu0 0.0
    %1629 = vmatpush1.msra.mxu0 0.0
    %1630 = vmatprep.subr.mxu0 0.0
    %1631 = vmatpush1.msra.mxu0 0.0
    %1632 = vmatprep.subr.mxu0 0.0
    %1633 = vmatpush1.msra.mxu0 0.0
    %1634 = vmatprep.subr.mxu0 0.0
    %1635 = vmatpush1.msra.mxu0 0.0
    %1636 = vmatprep.subr.mxu0 0.0
    %1637 = vmatpush1.msra.mxu0 0.0
    %1638 = vmatprep.subr.mxu0 0.0
    %1639 = vmatpush1.msra.mxu0 0.0
    %1640 = vmatprep.subr.mxu0 0.0
    %1641 = vmatpush1.msra.mxu0 0.0
    %1642 = vmatprep.subr.mxu0 0.0
    %1643 = vmatpush1.msra.mxu0 0.0
    %1644 = vmatprep.subr.mxu0 0.0
    %1645 = vmatpush1.msra.mxu0 0.0
    %1646 = vmatprep.subr.mxu0 0.0
    %1647 = vmatpush1.msra.mxu0 0.0
    %1648 = vmatprep.subr.mxu0 0.0
    %1649 = vmatpush1.msra.mxu0 0.0
    %1650 = vmatprep.subr.mxu0 0.0
    %1651 = vmatpush1.msra.mxu0 0.0
    %1652 = vmatprep.subr.mxu0 0.0
    %1653 = vmatpush1.msra.mxu0 0.0
    %1654 = vmatprep.subr.mxu0 0.0
    %1655 = vmatpush1.msra.mxu0 0.0
    %1656 = vmatprep.subr.mxu0 0.0
    %1657 = vmatpush1.msra.mxu0 0.0
    %1658 = vmatprep.subr.mxu0 0.0
    %1659 = vmatpush1.msra.mxu0 0.0
    %1660 = vmatprep.subr.mxu0 0.0
    %1661 = vmatpush1.msra.mxu0 0.0
    %1662 = vmatprep.subr.mxu0 0.0
    %1663 = vmatpush1.msra.mxu0 0.0
    %1664 = vmatprep.subr.mxu0 0.0
    %1665 = vmatpush1.msra.mxu0 0.0
    %1666 = vmatprep.subr.mxu0 0.0
    %1667 = vmatpush1.msra.mxu0 0.0
    %1668 = vmatprep.subr.mxu0 0.0
    %1669 = vmatpush1.msra.mxu0 0.0
    %1670 = vmatprep.mubr.f32.mxu0 0.0
    %v1671 = vand.u32 %v910, 4294901760
    %1672 = vmatmul.mubr.f32.gmra.mrb[0].mxu0 %v1671
    %v1673 = vpop.f32.mrb[0].mxu0
    %v1674 = vadd.f32 %v1557, %v1673
    %v1675 = vpop.f32.mrb[0].mxu0
    %1676 = vmatprep.mubr.f32.mxu0 0.0
    %v1677 = vand.u32 %v913, 4294901760
    %1678 = vmatmul.mubr.f32.gmra.mrb[0].mxu0 %v1677
    %v1679 = vpop.f32.mrb[0].mxu0
    %v1680 = vadd.f32 %v1563, %v1679
    %v1681 = vpop.f32.mrb[0].mxu0
    %1682 = vmatprep.mubr.f32.mxu0 0.0
    %v1683 = vand.u32 %v916, 4294901760
    %1684 = vmatmul.mubr.f32.gmra.mrb[0].mxu0 %v1683
    %v1685 = vpop.f32.mrb[0].mxu0
    %v1686 = vadd.f32 %v1569, %v1685
    %v1687 = vpop.f32.mrb[0].mxu0
    %1688 = vmatprep.mubr.f32.mxu0 0.0
    %v1689 = vand.u32 %v919, 4294901760
    %1690 = vmatmul.mubr.f32.gmra.mrb[0].mxu0 %v1689
    %v1691 = vpop.f32.mrb[0].mxu0
    %v1692 = vadd.f32 %v1575, %v1691
    %v1693 = vpop.f32.mrb[0].mxu0
    %1694 = vmatprep.mubr.f32.mxu0 0.0
    %v1695 = vand.u32 %v922, 4294901760
    %1696 = vmatmul.mubr.f32.gmra.mrb[0].mxu0 %v1695
    %v1697 = vpop.f32.mrb[0].mxu0
    %v1698 = vadd.f32 %v1581, %v1697
    %v1699 = vpop.f32.mrb[0].mxu0
    %1700 = vmatprep.mubr.f32.mxu0 0.0
    %v1701 = vand.u32 %v925, 4294901760
    %1702 = vmatmul.mubr.f32.gmra.mrb[0].mxu0 %v1701
    %v1703 = vpop.f32.mrb[0].mxu0
    %v1704 = vadd.f32 %v1587, %v1703
    %v1705 = vpop.f32.mrb[0].mxu0
    %1706 = vmatprep.mubr.f32.mxu0 0.0
    %v1707 = vand.u32 %v928, 4294901760
    %1708 = vmatmul.mubr.f32.gmra.mrb[0].mxu0 %v1707
    %v1709 = vpop.f32.mrb[0].mxu0
    %v1710 = vadd.f32 %v1593, %v1709
    %v1711 = vpop.f32.mrb[0].mxu0
    %1712 = vmatprep.mubr.f32.mxu0 0.0
    %v1713 = vand.u32 %v931, 4294901760
    %1714 = vmatmul.mubr.f32.gmra.mrb[0].mxu0 %v1713
    %v1715 = vpop.f32.mrb[0].mxu0
    %v1716 = vadd.f32 %v1599, %v1715
    %v1717 = vpop.f32.mrb[0].mxu0
    %1718 = vdwg.mxu0
    %v1719 = vmax.f32 %v1674, 0.0
    %v1720 = vmax.f32 %v1680, 0.0
    %v1721 = vmax.f32 %v1686, 0.0
    %v1722 = vmax.f32 %v1692, 0.0
    %v1723 = vmax.f32 %v1698, 0.0
    %v1724 = vmax.f32 %v1704, 0.0
    %v1725 = vmax.f32 %v1710, 0.0
    %v1726 = vmax.f32 %v1716, 0.0
    %1727 = vst.msk [vmem:[#allocation2] sm:$0xff] %vm908, %v1719
    %1728 = vst.msk [vmem:[#allocation2 + $0x8] sm:$0xff] %vm908, %v1720
    %1731 = vrot.lane.b32.xlu0 %v1721, 96
    %v1732 = vpop.permute.xlu0 %1731
    %1733 = vrot.lane.b32.xlu0 %v1722, 96
    %v1734 = vpop.permute.xlu0 %1733
    %s1737 = scalar_lea.vmem [#allocation2], 16
    %1738 = vst.msk [vmem:[%s1737] sm:$0xff] %vm908, %v1732
    %1739 = vst.msk [vmem:[%s1737 + $0x8] sm:$0xff] %vm908, %v1734
    %1742 = vrot.lane.b32.xlu0 %v1723, 64
    %v1743 = vpop.permute.xlu0 %1742
    %1744 = vrot.lane.b32.xlu0 %v1724, 64
    %v1745 = vpop.permute.xlu0 %1744
    %s1748 = scalar_lea.vmem [#allocation2], 32
    %1749 = vst.msk [vmem:[%s1748] sm:$0xff] %vm908, %v1743
    %1750 = vst.msk [vmem:[%s1748 + $0x8] sm:$0xff] %vm908, %v1745
    %1753 = vrot.lane.b32.xlu0 %v1725, 32
    %v1754 = vpop.permute.xlu0 %1753
    %1755 = vrot.lane.b32.xlu0 %v1726, 32
    %v1756 = vpop.permute.xlu0 %1755
    %s1759 = scalar_lea.vmem [#allocation2], 48
    %1760 = vst.msk [vmem:[%s1759] sm:$0xff] %vm908, %v1754
    %1761 = vst.msk [vmem:[%s1759 + $0x8] sm:$0xff] %vm908, %v1756
    // Predicated region
    $region18: #{tpu_custom_call.1} parent=1 // pred_check
      _
    $region19: #{tpu_custom_call.1} parent=1 // pred_check_branch
      %1763 = sbr.rel (0) target = $region21
    $region20: #{tpu_custom_call.1} parent=1 // pred_region
      %s1765 = ssub.s32 1024, 1024
      %1766 = vsyncadd [#allocation3], %s1765
      %s1767 = sshll.u32 [#allocation2], 4
      %s1768 = int_to_ptr.vmem [resolvable:$true] %s1767
      %1773 = dma.vmem_to_hbm [thread:$0]  %s1768, 1024, %s4, [#allocation3], 128, 128, 8
    $region21: #{tpu_custom_call.1} parent=1 // pred_fallthru
      _
    // Predicated region
    $region22: #{tpu_custom_call.1} parent=1 // pred_check
      _
    $region23: #{tpu_custom_call.1} parent=1 // pred_check_branch
      %1775 = sbr.rel (0) target = $region25
    $region24: #{tpu_custom_call.1} parent=1 // pred_region
      %1776 = dma.done [#allocation3], 1024
    $region25: #{tpu_custom_call.1} parent=1 // pred_fallthru
      _
    %1777 = vsyncpa [#allocation3], 1

</llo_original>
